<compile_context>
chip_gen: v7x
topology: tpu7x:2x2x1
jax: 0.10.0
libtpu: 0.0.40
codegen_flags: <defaults>
</compile_context>

<pallas_src>
import functools

import numpy as np
import jax
import jax.numpy as jnp
from jax import lax
from jax.experimental import pallas as pl
from jax.experimental.pallas import tpu as pltpu

GN_GROUPS = 8
GN_EPS = 1e-5


def _frustum_tv_kernel(x_ref, tv_ref, wtv_ref, btv_ref, gamma_ref, beta_ref,
                       mcg_ref, mgc_ref, w9_ref, bconv_ref, o_ref, pad_ref, *,
                       spatial, out_spatial, stride, groups, x_dim, mxu_dtype):
    D, H, W = spatial
    Do, Ho, Wo = out_spatial
    cx_pack = x_ref.shape[-1]     # W * Cx  (lane-packed channels)
    co_pack = o_ref.shape[-1]     # Wo * Co (lane-packed output channels)

    # ---- fused t/v 1x1x1 convs (single lane-dense MXU matmul) + residual add ----
    x = x_ref[0].astype(jnp.float32)                                   # (D*H, W*Cx)
    tv = tv_ref[0].astype(mxu_dtype)                                   # (D*H, W*Ctv)
    y = x + jnp.dot(tv, wtv_ref[...],
                    preferred_element_type=jnp.float32) + btv_ref[...]

    # ---- GroupNorm(8): two-pass stats; big reductions on the XLU, tiny group matmuls ----
    inv_cnt = 1.0 / float(D * H * W * (x_dim // groups))
    s_c = jnp.sum(y, axis=0, keepdims=True)                            # (1, W*Cx)
    mu_g = jnp.dot(s_c, mcg_ref[...],
                   preferred_element_type=jnp.float32) * inv_cnt       # (1, G)
    mu_c = jnp.dot(mu_g, mgc_ref[...],
                   preferred_element_type=jnp.float32)                 # (1, W*Cx)
    d = y - mu_c
    sq_c = jnp.sum(d * d, axis=0, keepdims=True)                       # (1, W*Cx)
    var_g = jnp.dot(sq_c, mcg_ref[...],
                    preferred_element_type=jnp.float32) * inv_cnt      # (1, G)
    inv_g = lax.rsqrt(var_g + GN_EPS)
    a_c = jnp.dot(inv_g, mgc_ref[...],
                  preferred_element_type=jnp.float32) * gamma_ref[...] # folded affine scale
    yn = d * a_c + beta_ref[...]

    # ---- SiLU ----
    act = yn * (1.0 / (1.0 + jnp.exp(-yn)))

    # ---- in-VMEM zero halo along D/H (W padding is folded into the conv weights) ----
    pad_ref[...] = jnp.zeros(pad_ref.shape, pad_ref.dtype)
    pad_ref[1:1 + D, 1:1 + H, :] = act.reshape(D, H, cx_pack).astype(pad_ref.dtype)

    # ---- 3x3x3 conv: kw + output-W folded into K/N -> 9 lane-dense matmuls ----
    acc = jnp.zeros((Do * Ho, co_pack), jnp.float32)
    for kd in range(3):
        for kh in range(3):
            if stride == 1:
                patch = pad_ref[kd:kd + Do, kh:kh + Ho, :]             # (Do, Ho, W*Cx)
            else:
                # TODO(synk): stride>1 path uses strided sublane/major reads; untested here.
                patch = pad_ref[pl.ds(kd, Do, stride=stride),
                                pl.ds(kh, Ho, stride=stride), :]
            acc = acc + jnp.dot(patch.reshape(Do * Ho, cx_pack).astype(mxu_dtype),
                                w9_ref[kd * 3 + kh],
                                preferred_element_type=jnp.float32)

    out = acc + bconv_ref[...]
    o_ref[0] = out.reshape(Do, Ho, co_pack).astype(o_ref.dtype)


class FrustumTVBlockPallas:
    def __init__(self, x_dim, t_dim, v_dim, out_dim, stride, key,
                 mxu_dtype=jnp.float32):
        assert x_dim % GN_GROUPS == 0
        self.x_dim, self.t_dim, self.v_dim = x_dim, t_dim, v_dim
        self.out_dim, self.stride = out_dim, stride
        self.mxu_dtype = mxu_dtype

        ks = jax.random.split(key, 8)
        sc = 0.1
        # 1x1x1 conv weights stored pre-transposed to (Cin, Cout)
        self.wt = sc * jax.random.normal(ks[0], (t_dim, x_dim), jnp.float32)
        self.bt = sc * jax.random.normal(ks[1], (1, x_dim), jnp.float32)
        self.wv = sc * jax.random.normal(ks[2], (v_dim, x_dim), jnp.float32)
        self.bv = sc * jax.random.normal(ks[3], (1, x_dim), jnp.float32)
        # GroupNorm affine params
        self.gamma = 1.0 + sc * jax.random.normal(ks[4], (1, x_dim), jnp.float32)
        self.beta = sc * jax.random.normal(ks[5], (1, x_dim), jnp.float32)
        # 3x3x3 conv weight stored as DHWIO: (3, 3, 3, x_dim, out_dim)
        self.wconv = sc * jax.random.normal(ks[6], (3, 3, 3, x_dim, out_dim), jnp.float32)
        self.bconv = sc * jax.random.normal(ks[7], (1, out_dim), jnp.float32)

        self._pack_cache = {}

    # ---- host-side lane packing of all parameters (cached per spatial shape) ----
    def _packed_params(self, W, Wo):
        key = (W, Wo)
        if key in self._pack_cache:
            return self._pack_cache[key]

        Cx, Ct, Cv, Co = self.x_dim, self.t_dim, self.v_dim, self.out_dim
        Ctv = Ct + Cv
        s = self.stride
        md = self.mxu_dtype

        wtv = np.concatenate([np.asarray(self.wt), np.asarray(self.wv)], axis=0)  # (Ctv, Cx)
        # block-diagonal replication over the W voxels packed into the lane dim
        wtv_blk = np.zeros((W * Ctv, W * Cx), np.float32)
        for w in range(W):
            wtv_blk[w * Ctv:(w + 1) * Ctv, w * Cx:(w + 1) * Cx] = wtv

        btv_row = np.tile(np.asarray(self.bt + self.bv).reshape(-1), W)[None, :]
        gamma_row = np.tile(np.asarray(self.gamma).reshape(-1), W)[None, :]
        beta_row = np.tile(np.asarray(self.beta).reshape(-1), W)[None, :]

        # group-indicator matrices on the packed lane layout (lane = w*Cx + c)
        grp = (np.arange(W * Cx) % Cx) // (Cx // GN_GROUPS)
        mcg = (grp[:, None] == np.arange(GN_GROUPS)[None, :]).astype(np.float32)  # (W*Cx, G)
        mgc = np.ascontiguousarray(mcg.T)                                          # (G, W*Cx)

        # 3x3x3 conv weight with kw taps and the output-W axis folded in: (9, W*Cx, Wo*Co).
        # Zero rows implement the W padding (padding contributes 0 to the conv sum).
        wc = np.asarray(self.wconv)
        w9 = np.zeros((9, W * Cx, Wo * Co), np.float32)
        for kd in range(3):
            for kh in range(3):
                for wo in range(Wo):
                    for kw in range(3):
                        wi = wo * s + kw - 1
                        if 0 <= wi < W:
                            w9[kd * 3 + kh,
                               wi * Cx:(wi + 1) * Cx,
                               wo * Co:(wo + 1) * Co] = wc[kd, kh, kw]
        bconv_row = np.tile(np.asarray(self.bconv).reshape(-1), Wo)[None, :]

        packed = (jnp.asarray(wtv_blk, md), jnp.asarray(btv_row, jnp.float32),
                  jnp.asarray(gamma_row, jnp.float32), jnp.asarray(beta_row, jnp.float32),
                  jnp.asarray(mcg, jnp.float32), jnp.asarray(mgc, jnp.float32),
                  jnp.asarray(w9, md), jnp.asarray(bconv_row, jnp.float32))
        self._pack_cache[key] = packed
        return packed

    def __call__(self, x, t, v):
        # x: (N, x_dim, D, H, W), t: (N, t_dim, D, H, W), v: (N, v_dim, D, H, W)  [NCDHW]
        N, Cx, D, H, W = x.shape
        Ct, Cv = t.shape[1], v.shape[1]
        Ctv = Ct + Cv
        Co = self.out_dim
        s = self.stride
        Do = (D + 2 - 3) // s + 1
        Ho = (H + 2 - 3) // s + 1
        Wo = (W + 2 - 3) // s + 1
        DH = D * H
        md = self.mxu_dtype

        to_cl = lambda a: jnp.transpose(a, (0, 2, 3, 4, 1))
        # lane-packed activations: rows = (d,h), lanes = w*C + c  (contiguous reshape, free)
        x_p = to_cl(x).reshape(N, DH, W * Cx).astype(md)
        tv_p = jnp.concatenate([to_cl(t), to_cl(v)], axis=-1).reshape(N, DH, W * Ctv).astype(md)

        (wtv_blk, btv_row, gamma_row, beta_row,
         mcg, mgc, w9, bconv_row) = self._packed_params(W, Wo)

        kernel = functools.partial(
            _frustum_tv_kernel,
            spatial=(D, H, W), out_spatial=(Do, Ho, Wo),
            stride=s, groups=GN_GROUPS, x_dim=Cx, mxu_dtype=md)

        out_packed = pl.pallas_call(
            kernel,
            out_shape=jax.ShapeDtypeStruct((N, Do, Ho, Wo * Co), jnp.float32),
            grid_spec=pltpu.PrefetchScalarGridSpec(
                num_scalar_prefetch=0,
                grid=(N,),   # TODO(synk): add a spatial grid axis when N==1 so both v7x TCs get work
                in_specs=[
                    pl.BlockSpec((1, DH, W * Cx), lambda n: (n, 0, 0)),
                    pl.BlockSpec((1, DH, W * Ctv), lambda n: (n, 0, 0)),
                    pl.BlockSpec(wtv_blk.shape, lambda n: (0, 0)),
                    pl.BlockSpec(btv_row.shape, lambda n: (0, 0)),
                    pl.BlockSpec(gamma_row.shape, lambda n: (0, 0)),
                    pl.BlockSpec(beta_row.shape, lambda n: (0, 0)),
                    pl.BlockSpec(mcg.shape, lambda n: (0, 0)),
                    pl.BlockSpec(mgc.shape, lambda n: (0, 0)),
                    pl.BlockSpec(w9.shape, lambda n: (0, 0, 0)),
                    pl.BlockSpec(bconv_row.shape, lambda n: (0, 0)),
                ],
                out_specs=pl.BlockSpec((1, Do, Ho, Wo * Co), lambda n: (n, 0, 0, 0)),
                scratch_shapes=[pltpu.VMEM((D + 2, H + 2, W * Cx), jnp.float32)],
            ),
            compiler_params=pltpu.CompilerParams(
                dimension_semantics=("parallel",),
                vmem_limit_bytes=32 * 1024 * 1024),
        )(x_p, tv_p, wtv_blk, btv_row, gamma_row, beta_row, mcg, mgc, w9, bconv_row)

        out = out_packed.reshape(N, Do, Ho, Wo, Co)
        return jnp.transpose(out, (0, 4, 1, 2, 3))   # back to PyTorch NCDHW

    # Pure-JAX reference (same params) for correctness checking.
    def reference(self, x, t, v):
        N, Cx, D, H, W = x.shape
        to_cl = lambda a: jnp.transpose(a, (0, 2, 3, 4, 1))
        xc, tc, vc = to_cl(x), to_cl(t), to_cl(v)
        y = (xc + jnp.einsum('ndhwc,ck->ndhwk', tc, self.wt) + self.bt.reshape(1, 1, 1, 1, -1)
                + jnp.einsum('ndhwc,ck->ndhwk', vc, self.wv) + self.bv.reshape(1, 1, 1, 1, -1))
        G, Cg = GN_GROUPS, Cx // GN_GROUPS
        yg = y.reshape(N, D, H, W, G, Cg)
        mu = jnp.mean(yg, axis=(1, 2, 3, 5), keepdims=True)
        var = jnp.mean((yg - mu) ** 2, axis=(1, 2, 3, 5), keepdims=True)
        yn = ((yg - mu) / jnp.sqrt(var + GN_EPS)).reshape(N, D, H, W, Cx)
        yn = yn * self.gamma.reshape(1, 1, 1, 1, -1) + self.beta.reshape(1, 1, 1, 1, -1)
        a = yn * jax.nn.sigmoid(yn)
        s = self.stride
        out = lax.conv_general_dilated(
            a, self.wconv, window_strides=(s, s, s), padding=((1, 1), (1, 1), (1, 1)),
            dimension_numbers=('NDHWC', 'DHWIO', 'NDHWC'))
        out = out + self.bconv.reshape(1, 1, 1, 1, -1)
        return jnp.transpose(out, (0, 4, 1, 2, 3))


if __name__ == "__main__":
    key = jax.random.PRNGKey(0)
    kx, kt, kv, kp = jax.random.split(key, 4)

    N = 2
    x_dim, t_dim, v_dim, out_dim = 16, 8, 8, 16
    D = H = W = 8
    stride = 1

    x = jax.random.normal(kx, (N, x_dim, D, H, W), jnp.float32)
    t = jax.random.normal(kt, (N, t_dim, D, H, W), jnp.float32)
    v = jax.random.normal(kv, (N, v_dim, D, H, W), jnp.float32)

    # f32 MXU path
    block = FrustumTVBlockPallas(x_dim, t_dim, v_dim, out_dim, stride, kp)
    out = jax.block_until_ready(block(x, t, v))
    ref = jax.block_until_ready(block.reference(x, t, v))
    assert out.shape == ref.shape, (out.shape, ref.shape)
    max_err = float(jnp.max(jnp.abs(out - ref)))
    assert jnp.allclose(out, ref, atol=2e-3, rtol=2e-3), f"f32 max abs err {max_err}"

    # bf16 MXU fast path (v5e/v6e feedback): bf16 dot inputs / HBM activations, f32 accum.
    block16 = FrustumTVBlockPallas(x_dim, t_dim, v_dim, out_dim, stride, kp,
                                   mxu_dtype=jnp.bfloat16)
    out16 = jax.block_until_ready(block16(x, t, v))
    max_err16 = float(jnp.max(jnp.abs(out16 - ref)))
    assert jnp.allclose(out16, ref, atol=3e-2, rtol=3e-2), f"bf16 max abs err {max_err16}"

    print("KERNEL_OK")
</pallas_src>

<mosaic_0001>
module attributes {stable_mosaic.version = 11 : i64} {
  func.func @_frustum_tv_kernel(%arg0: i32, %arg1: memref<1x64x128xf32, #tpu.memory_space<vmem>>, %arg2: memref<1x64x128xf32, #tpu.memory_space<vmem>>, %arg3: memref<128x128xf32, #tpu.memory_space<vmem>>, %arg4: memref<1x128xf32, #tpu.memory_space<vmem>>, %arg5: memref<1x128xf32, #tpu.memory_space<vmem>>, %arg6: memref<1x128xf32, #tpu.memory_space<vmem>>, %arg7: memref<128x8xf32, #tpu.memory_space<vmem>>, %arg8: memref<8x128xf32, #tpu.memory_space<vmem>>, %arg9: memref<9x128x128xf32, #tpu.memory_space<vmem>>, %arg10: memref<1x128xf32, #tpu.memory_space<vmem>>, %arg11: memref<1x8x8x128xf32, #tpu.memory_space<vmem>>, %arg12: memref<10x10x128xf32, #tpu.memory_space<vmem>>) attributes {dimension_semantics = [#tpu.dimension_semantics<parallel>], iteration_bounds = array<i64: 2>, scalar_prefetch = 0 : i64, scratch_operands = 1 : i64, tpu.core_type = #tpu.core_type<tc>, window_params = [{transform_indices = @transform_0, window_bounds = array<i64: 1, 64, 128>}, {transform_indices = @transform_1, window_bounds = array<i64: 1, 64, 128>}, {pipeline_mode = #tpu.pipeline_mode<synchronous>, transform_indices = @transform_2, window_bounds = array<i64: 128, 128>}, {pipeline_mode = #tpu.pipeline_mode<synchronous>, transform_indices = @transform_3, window_bounds = array<i64: 1, 128>}, {pipeline_mode = #tpu.pipeline_mode<synchronous>, transform_indices = @transform_4, window_bounds = array<i64: 1, 128>}, {pipeline_mode = #tpu.pipeline_mode<synchronous>, transform_indices = @transform_5, window_bounds = array<i64: 1, 128>}, {pipeline_mode = #tpu.pipeline_mode<synchronous>, transform_indices = @transform_6, window_bounds = array<i64: 128, 8>}, {pipeline_mode = #tpu.pipeline_mode<synchronous>, transform_indices = @transform_7, window_bounds = array<i64: 8, 128>}, {pipeline_mode = #tpu.pipeline_mode<synchronous>, transform_indices = @transform_8, window_bounds = array<i64: 9, 128, 128>}, {pipeline_mode = #tpu.pipeline_mode<synchronous>, transform_indices = @transform_9, window_bounds = array<i64: 1, 128>}, {transform_indices = @transform_10, window_bounds = array<i64: 1, 8, 8, 128>}]} {
    %c0 = arith.constant 0 : index
    %c0_0 = arith.constant 0 : index
    %c0_1 = arith.constant 0 : index
    %0 = vector.load %arg1[%c0, %c0_0, %c0_1] : memref<1x64x128xf32, #tpu.memory_space<vmem>>, vector<1x64x128xf32>
    %1 = vector.shape_cast %0 : vector<1x64x128xf32> to vector<64x128xf32>
    %c0_2 = arith.constant 0 : index
    %c0_3 = arith.constant 0 : index
    %c0_4 = arith.constant 0 : index
    %2 = vector.load %arg2[%c0_2, %c0_3, %c0_4] : memref<1x64x128xf32, #tpu.memory_space<vmem>>, vector<1x64x128xf32>
    %3 = vector.shape_cast %2 : vector<1x64x128xf32> to vector<64x128xf32>
    %c0_5 = arith.constant 0 : index
    %c0_6 = arith.constant 0 : index
    %4 = vector.load %arg3[%c0_5, %c0_6] : memref<128x128xf32, #tpu.memory_space<vmem>>, vector<128x128xf32>
    %cst = arith.constant dense<0.000000e+00> : vector<64x128xf32>
    %5 = tpu.matmul %3, %4, %cst {dimension_numbers = #tpu.dot_dimension_numbers<[1], [0], [0], [1], [0, 0, 1, 1], [], []>} : vector<64x128xf32>, vector<128x128xf32>, vector<64x128xf32> -> vector<64x128xf32>
    %6 = arith.addf %1, %5 : vector<64x128xf32>
    %c0_7 = arith.constant 0 : index
    %c0_8 = arith.constant 0 : index
    %7 = vector.load %arg4[%c0_7, %c0_8] : memref<1x128xf32, #tpu.memory_space<vmem>>, vector<1x128xf32>
    %8 = vector.broadcast %7 : vector<1x128xf32> to vector<64x128xf32>
    %9 = arith.addf %6, %8 : vector<64x128xf32>
    %cst_9 = arith.constant dense<0.000000e+00> : vector<128xf32>
    %10 = vector.multi_reduction <add>, %9, %cst_9 [0] : vector<64x128xf32> to vector<128xf32>
    %11 = vector.shape_cast %10 : vector<128xf32> to vector<1x128xf32>
    %c0_10 = arith.constant 0 : index
    %c0_11 = arith.constant 0 : index
    %12 = vector.load %arg7[%c0_10, %c0_11] : memref<128x8xf32, #tpu.memory_space<vmem>>, vector<128x8xf32>
    %cst_12 = arith.constant dense<0.000000e+00> : vector<1x8xf32>
    %13 = tpu.matmul %11, %12, %cst_12 {dimension_numbers = #tpu.dot_dimension_numbers<[1], [0], [0], [1], [0, 0, 1, 1], [], []>} : vector<1x128xf32>, vector<128x8xf32>, vector<1x8xf32> -> vector<1x8xf32>
    %cst_13 = arith.constant 9.765625E-4 : f32
    %14 = vector.broadcast %cst_13 : f32 to vector<1x8xf32>
    %15 = arith.mulf %13, %14 : vector<1x8xf32>
    %c0_14 = arith.constant 0 : index
    %c0_15 = arith.constant 0 : index
    %16 = vector.load %arg8[%c0_14, %c0_15] : memref<8x128xf32, #tpu.memory_space<vmem>>, vector<8x128xf32>
    %cst_16 = arith.constant dense<0.000000e+00> : vector<1x128xf32>
    %17 = tpu.matmul %15, %16, %cst_16 {dimension_numbers = #tpu.dot_dimension_numbers<[1], [0], [0], [1], [0, 0, 1, 1], [], []>} : vector<1x8xf32>, vector<8x128xf32>, vector<1x128xf32> -> vector<1x128xf32>
    %18 = vector.broadcast %17 : vector<1x128xf32> to vector<64x128xf32>
    %19 = arith.subf %9, %18 : vector<64x128xf32>
    %20 = arith.mulf %19, %19 : vector<64x128xf32>
    %cst_17 = arith.constant dense<0.000000e+00> : vector<128xf32>
    %21 = vector.multi_reduction <add>, %20, %cst_17 [0] : vector<64x128xf32> to vector<128xf32>
    %22 = vector.shape_cast %21 : vector<128xf32> to vector<1x128xf32>
    %c0_18 = arith.constant 0 : index
    %c0_19 = arith.constant 0 : index
    %23 = vector.load %arg7[%c0_18, %c0_19] : memref<128x8xf32, #tpu.memory_space<vmem>>, vector<128x8xf32>
    %cst_20 = arith.constant dense<0.000000e+00> : vector<1x8xf32>
    %24 = tpu.matmul %22, %23, %cst_20 {dimension_numbers = #tpu.dot_dimension_numbers<[1], [0], [0], [1], [0, 0, 1, 1], [], []>} : vector<1x128xf32>, vector<128x8xf32>, vector<1x8xf32> -> vector<1x8xf32>
    %cst_21 = arith.constant 9.765625E-4 : f32
    %25 = vector.broadcast %cst_21 : f32 to vector<1x8xf32>
    %26 = arith.mulf %24, %25 : vector<1x8xf32>
    %cst_22 = arith.constant 9.99999974E-6 : f32
    %27 = vector.broadcast %cst_22 : f32 to vector<1x8xf32>
    %28 = arith.addf %26, %27 : vector<1x8xf32>
    %29 = math.rsqrt %28 : vector<1x8xf32>
    %c0_23 = arith.constant 0 : index
    %c0_24 = arith.constant 0 : index
    %30 = vector.load %arg8[%c0_23, %c0_24] : memref<8x128xf32, #tpu.memory_space<vmem>>, vector<8x128xf32>
    %cst_25 = arith.constant dense<0.000000e+00> : vector<1x128xf32>
    %31 = tpu.matmul %29, %30, %cst_25 {dimension_numbers = #tpu.dot_dimension_numbers<[1], [0], [0], [1], [0, 0, 1, 1], [], []>} : vector<1x8xf32>, vector<8x128xf32>, vector<1x128xf32> -> vector<1x128xf32>
    %c0_26 = arith.constant 0 : index
    %c0_27 = arith.constant 0 : index
    %32 = vector.load %arg5[%c0_26, %c0_27] : memref<1x128xf32, #tpu.memory_space<vmem>>, vector<1x128xf32>
    %33 = arith.mulf %31, %32 : vector<1x128xf32>
    %34 = vector.broadcast %33 : vector<1x128xf32> to vector<64x128xf32>
    %35 = arith.mulf %19, %34 : vector<64x128xf32>
    %c0_28 = arith.constant 0 : index
    %c0_29 = arith.constant 0 : index
    %36 = vector.load %arg6[%c0_28, %c0_29] : memref<1x128xf32, #tpu.memory_space<vmem>>, vector<1x128xf32>
    %37 = vector.broadcast %36 : vector<1x128xf32> to vector<64x128xf32>
    %38 = arith.addf %35, %37 : vector<64x128xf32>
    %cst_30 = arith.constant 0.000000e+00 : f32
    %39 = vector.broadcast %cst_30 : f32 to vector<64x128xf32>
    %40 = arith.subf %39, %38 : vector<64x128xf32>
    %41 = math.exp %40 : vector<64x128xf32>
    %cst_31 = arith.constant 1.000000e+00 : f32
    %42 = vector.broadcast %cst_31 : f32 to vector<64x128xf32>
    %43 = arith.addf %42, %41 : vector<64x128xf32>
    %cst_32 = arith.constant 1.000000e+00 : f32
    %44 = vector.broadcast %cst_32 : f32 to vector<64x128xf32>
    %45 = arith.divf %44, %43 : vector<64x128xf32>
    %46 = arith.mulf %38, %45 : vector<64x128xf32>
    %cst_33 = arith.constant 0.000000e+00 : f32
    %47 = vector.broadcast %cst_33 : f32 to vector<10x10x128xf32>
    %c0_34 = arith.constant 0 : index
    %c0_35 = arith.constant 0 : index
    %c0_36 = arith.constant 0 : index
    %48 = vector.load %arg12[%c0_34, %c0_35, %c0_36] : memref<10x10x128xf32, #tpu.memory_space<vmem>>, vector<10x10x128xf32>
    tpu.vector_store %arg12[%c0_34, %c0_35, %c0_36], %47 {strides = array<i32>} : memref<10x10x128xf32, #tpu.memory_space<vmem>>, vector<10x10x128xf32>,
    %49 = vector.shape_cast %46 : vector<64x128xf32> to vector<8x8x128xf32>
    %c1 = arith.constant 1 : index
    %c1_37 = arith.constant 1 : index
    %c0_38 = arith.constant 0 : index
    %50 = vector.load %arg12[%c1, %c1_37, %c0_38] : memref<10x10x128xf32, #tpu.memory_space<vmem>>, vector<8x8x128xf32>
    tpu.vector_store %arg12[%c1, %c1_37, %c0_38], %49 {strides = array<i32>} : memref<10x10x128xf32, #tpu.memory_space<vmem>>, vector<8x8x128xf32>,
    %cst_39 = arith.constant 0.000000e+00 : f32
    %51 = vector.broadcast %cst_39 : f32 to vector<64x128xf32>
    %c0_40 = arith.constant 0 : index
    %c0_41 = arith.constant 0 : index
    %c0_42 = arith.constant 0 : index
    %52 = vector.load %arg12[%c0_40, %c0_41, %c0_42] : memref<10x10x128xf32, #tpu.memory_space<vmem>>, vector<8x8x128xf32>
    %53 = vector.shape_cast %52 : vector<8x8x128xf32> to vector<64x128xf32>
    %c0_43 = arith.constant 0 : index
    %c0_44 = arith.constant 0 : index
    %c0_45 = arith.constant 0 : index
    %54 = vector.load %arg9[%c0_43, %c0_44, %c0_45] : memref<9x128x128xf32, #tpu.memory_space<vmem>>, vector<1x128x128xf32>
    %55 = vector.shape_cast %54 : vector<1x128x128xf32> to vector<128x128xf32>
    %cst_46 = arith.constant dense<0.000000e+00> : vector<64x128xf32>
    %56 = tpu.matmul %53, %55, %cst_46 {dimension_numbers = #tpu.dot_dimension_numbers<[1], [0], [0], [1], [0, 0, 1, 1], [], []>} : vector<64x128xf32>, vector<128x128xf32>, vector<64x128xf32> -> vector<64x128xf32>
    %57 = arith.addf %51, %56 : vector<64x128xf32>
    %c0_47 = arith.constant 0 : index
    %c1_48 = arith.constant 1 : index
    %c0_49 = arith.constant 0 : index
    %58 = vector.load %arg12[%c0_47, %c1_48, %c0_49] : memref<10x10x128xf32, #tpu.memory_space<vmem>>, vector<8x8x128xf32>
    %59 = vector.shape_cast %58 : vector<8x8x128xf32> to vector<64x128xf32>
    %c1_50 = arith.constant 1 : index
    %c0_51 = arith.constant 0 : index
    %c0_52 = arith.constant 0 : index
    %60 = vector.load %arg9[%c1_50, %c0_51, %c0_52] : memref<9x128x128xf32, #tpu.memory_space<vmem>>, vector<1x128x128xf32>
    %61 = vector.shape_cast %60 : vector<1x128x128xf32> to vector<128x128xf32>
    %cst_53 = arith.constant dense<0.000000e+00> : vector<64x128xf32>
    %62 = tpu.matmul %59, %61, %cst_53 {dimension_numbers = #tpu.dot_dimension_numbers<[1], [0], [0], [1], [0, 0, 1, 1], [], []>} : vector<64x128xf32>, vector<128x128xf32>, vector<64x128xf32> -> vector<64x128xf32>
    %63 = arith.addf %57, %62 : vector<64x128xf32>
    %c0_54 = arith.constant 0 : index
    %c2 = arith.constant 2 : index
    %c0_55 = arith.constant 0 : index
    %64 = vector.load %arg12[%c0_54, %c2, %c0_55] : memref<10x10x128xf32, #tpu.memory_space<vmem>>, vector<8x8x128xf32>
    %65 = vector.shape_cast %64 : vector<8x8x128xf32> to vector<64x128xf32>
    %c2_56 = arith.constant 2 : index
    %c0_57 = arith.constant 0 : index
    %c0_58 = arith.constant 0 : index
    %66 = vector.load %arg9[%c2_56, %c0_57, %c0_58] : memref<9x128x128xf32, #tpu.memory_space<vmem>>, vector<1x128x128xf32>
    %67 = vector.shape_cast %66 : vector<1x128x128xf32> to vector<128x128xf32>
    %cst_59 = arith.constant dense<0.000000e+00> : vector<64x128xf32>
    %68 = tpu.matmul %65, %67, %cst_59 {dimension_numbers = #tpu.dot_dimension_numbers<[1], [0], [0], [1], [0, 0, 1, 1], [], []>} : vector<64x128xf32>, vector<128x128xf32>, vector<64x128xf32> -> vector<64x128xf32>
    %69 = arith.addf %63, %68 : vector<64x128xf32>
    %c1_60 = arith.constant 1 : index
    %c0_61 = arith.constant 0 : index
    %c0_62 = arith.constant 0 : index
    %70 = vector.load %arg12[%c1_60, %c0_61, %c0_62] : memref<10x10x128xf32, #tpu.memory_space<vmem>>, vector<8x8x128xf32>
    %71 = vector.shape_cast %70 : vector<8x8x128xf32> to vector<64x128xf32>
    %c3 = arith.constant 3 : index
    %c0_63 = arith.constant 0 : index
    %c0_64 = arith.constant 0 : index
    %72 = vector.load %arg9[%c3, %c0_63, %c0_64] : memref<9x128x128xf32, #tpu.memory_space<vmem>>, vector<1x128x128xf32>
    %73 = vector.shape_cast %72 : vector<1x128x128xf32> to vector<128x128xf32>
    %cst_65 = arith.constant dense<0.000000e+00> : vector<64x128xf32>
    %74 = tpu.matmul %71, %73, %cst_65 {dimension_numbers = #tpu.dot_dimension_numbers<[1], [0], [0], [1], [0, 0, 1, 1], [], []>} : vector<64x128xf32>, vector<128x128xf32>, vector<64x128xf32> -> vector<64x128xf32>
    %75 = arith.addf %69, %74 : vector<64x128xf32>
    %c1_66 = arith.constant 1 : index
    %c1_67 = arith.constant 1 : index
    %c0_68 = arith.constant 0 : index
    %76 = vector.load %arg12[%c1_66, %c1_67, %c0_68] : memref<10x10x128xf32, #tpu.memory_space<vmem>>, vector<8x8x128xf32>
    %77 = vector.shape_cast %76 : vector<8x8x128xf32> to vector<64x128xf32>
    %c4 = arith.constant 4 : index
    %c0_69 = arith.constant 0 : index
    %c0_70 = arith.constant 0 : index
    %78 = vector.load %arg9[%c4, %c0_69, %c0_70] : memref<9x128x128xf32, #tpu.memory_space<vmem>>, vector<1x128x128xf32>
    %79 = vector.shape_cast %78 : vector<1x128x128xf32> to vector<128x128xf32>
    %cst_71 = arith.constant dense<0.000000e+00> : vector<64x128xf32>
    %80 = tpu.matmul %77, %79, %cst_71 {dimension_numbers = #tpu.dot_dimension_numbers<[1], [0], [0], [1], [0, 0, 1, 1], [], []>} : vector<64x128xf32>, vector<128x128xf32>, vector<64x128xf32> -> vector<64x128xf32>
    %81 = arith.addf %75, %80 : vector<64x128xf32>
    %c1_72 = arith.constant 1 : index
    %c2_73 = arith.constant 2 : index
    %c0_74 = arith.constant 0 : index
    %82 = vector.load %arg12[%c1_72, %c2_73, %c0_74] : memref<10x10x128xf32, #tpu.memory_space<vmem>>, vector<8x8x128xf32>
    %83 = vector.shape_cast %82 : vector<8x8x128xf32> to vector<64x128xf32>
    %c5 = arith.constant 5 : index
    %c0_75 = arith.constant 0 : index
    %c0_76 = arith.constant 0 : index
    %84 = vector.load %arg9[%c5, %c0_75, %c0_76] : memref<9x128x128xf32, #tpu.memory_space<vmem>>, vector<1x128x128xf32>
    %85 = vector.shape_cast %84 : vector<1x128x128xf32> to vector<128x128xf32>
    %cst_77 = arith.constant dense<0.000000e+00> : vector<64x128xf32>
    %86 = tpu.matmul %83, %85, %cst_77 {dimension_numbers = #tpu.dot_dimension_numbers<[1], [0], [0], [1], [0, 0, 1, 1], [], []>} : vector<64x128xf32>, vector<128x128xf32>, vector<64x128xf32> -> vector<64x128xf32>
    %87 = arith.addf %81, %86 : vector<64x128xf32>
    %c2_78 = arith.constant 2 : index
    %c0_79 = arith.constant 0 : index
    %c0_80 = arith.constant 0 : index
    %88 = vector.load %arg12[%c2_78, %c0_79, %c0_80] : memref<10x10x128xf32, #tpu.memory_space<vmem>>, vector<8x8x128xf32>
    %89 = vector.shape_cast %88 : vector<8x8x128xf32> to vector<64x128xf32>
    %c6 = arith.constant 6 : index
    %c0_81 = arith.constant 0 : index
    %c0_82 = arith.constant 0 : index
    %90 = vector.load %arg9[%c6, %c0_81, %c0_82] : memref<9x128x128xf32, #tpu.memory_space<vmem>>, vector<1x128x128xf32>
    %91 = vector.shape_cast %90 : vector<1x128x128xf32> to vector<128x128xf32>
    %cst_83 = arith.constant dense<0.000000e+00> : vector<64x128xf32>
    %92 = tpu.matmul %89, %91, %cst_83 {dimension_numbers = #tpu.dot_dimension_numbers<[1], [0], [0], [1], [0, 0, 1, 1], [], []>} : vector<64x128xf32>, vector<128x128xf32>, vector<64x128xf32> -> vector<64x128xf32>
    %93 = arith.addf %87, %92 : vector<64x128xf32>
    %c2_84 = arith.constant 2 : index
    %c1_85 = arith.constant 1 : index
    %c0_86 = arith.constant 0 : index
    %94 = vector.load %arg12[%c2_84, %c1_85, %c0_86] : memref<10x10x128xf32, #tpu.memory_space<vmem>>, vector<8x8x128xf32>
    %95 = vector.shape_cast %94 : vector<8x8x128xf32> to vector<64x128xf32>
    %c7 = arith.constant 7 : index
    %c0_87 = arith.constant 0 : index
    %c0_88 = arith.constant 0 : index
    %96 = vector.load %arg9[%c7, %c0_87, %c0_88] : memref<9x128x128xf32, #tpu.memory_space<vmem>>, vector<1x128x128xf32>
    %97 = vector.shape_cast %96 : vector<1x128x128xf32> to vector<128x128xf32>
    %cst_89 = arith.constant dense<0.000000e+00> : vector<64x128xf32>
    %98 = tpu.matmul %95, %97, %cst_89 {dimension_numbers = #tpu.dot_dimension_numbers<[1], [0], [0], [1], [0, 0, 1, 1], [], []>} : vector<64x128xf32>, vector<128x128xf32>, vector<64x128xf32> -> vector<64x128xf32>
    %99 = arith.addf %93, %98 : vector<64x128xf32>
    %c2_90 = arith.constant 2 : index
    %c2_91 = arith.constant 2 : index
    %c0_92 = arith.constant 0 : index
    %100 = vector.load %arg12[%c2_90, %c2_91, %c0_92] : memref<10x10x128xf32, #tpu.memory_space<vmem>>, vector<8x8x128xf32>
    %101 = vector.shape_cast %100 : vector<8x8x128xf32> to vector<64x128xf32>
    %c8 = arith.constant 8 : index
    %c0_93 = arith.constant 0 : index
    %c0_94 = arith.constant 0 : index
    %102 = vector.load %arg9[%c8, %c0_93, %c0_94] : memref<9x128x128xf32, #tpu.memory_space<vmem>>, vector<1x128x128xf32>
    %103 = vector.shape_cast %102 : vector<1x128x128xf32> to vector<128x128xf32>
    %cst_95 = arith.constant dense<0.000000e+00> : vector<64x128xf32>
    %104 = tpu.matmul %101, %103, %cst_95 {dimension_numbers = #tpu.dot_dimension_numbers<[1], [0], [0], [1], [0, 0, 1, 1], [], []>} : vector<64x128xf32>, vector<128x128xf32>, vector<64x128xf32> -> vector<64x128xf32>
    %105 = arith.addf %99, %104 : vector<64x128xf32>
    %c0_96 = arith.constant 0 : index
    %c0_97 = arith.constant 0 : index
    %106 = vector.load %arg10[%c0_96, %c0_97] : memref<1x128xf32, #tpu.memory_space<vmem>>, vector<1x128xf32>
    %107 = vector.broadcast %106 : vector<1x128xf32> to vector<64x128xf32>
    %108 = arith.addf %105, %107 : vector<64x128xf32>
    %109 = vector.shape_cast %108 : vector<64x128xf32> to vector<8x8x128xf32>
    %c0_98 = arith.constant 0 : index
    %c0_99 = arith.constant 0 : index
    %c0_100 = arith.constant 0 : index
    %c0_101 = arith.constant 0 : index
    %110 = vector.load %arg11[%c0_98, %c0_99, %c0_100, %c0_101] : memref<1x8x8x128xf32, #tpu.memory_space<vmem>>, vector<1x8x8x128xf32>
    %111 = vector.shape_cast %110 : vector<1x8x8x128xf32> to vector<8x8x128xf32>
    %112 = vector.shape_cast %109 : vector<8x8x128xf32> to vector<1x8x8x128xf32>
    tpu.vector_store %arg11[%c0_98, %c0_99, %c0_100, %c0_101], %112 {strides = array<i32>} : memref<1x8x8x128xf32, #tpu.memory_space<vmem>>, vector<1x8x8x128xf32>,
    return
  }
  func.func @transform_0(%arg0: i32) -> (i32, i32, i32) {
    %c0_i32 = arith.constant 0 : i32
    %c0_i32_0 = arith.constant 0 : i32
    %c0_i32_1 = arith.constant 0 : i32
    return %arg0, %c0_i32, %c0_i32_0 : i32, i32, i32
  }
  func.func @transform_1(%arg0: i32) -> (i32, i32, i32) {
    %c0_i32 = arith.constant 0 : i32
    %c0_i32_0 = arith.constant 0 : i32
    %c0_i32_1 = arith.constant 0 : i32
    return %arg0, %c0_i32, %c0_i32_0 : i32, i32, i32
  }
  func.func @transform_2(%arg0: i32) -> (i32, i32) {
    %c0_i32 = arith.constant 0 : i32
    %c0_i32_0 = arith.constant 0 : i32
    %c0_i32_1 = arith.constant 0 : i32
    return %c0_i32, %c0_i32_0 : i32, i32
  }
  func.func @transform_3(%arg0: i32) -> (i32, i32) {
    %c0_i32 = arith.constant 0 : i32
    %c0_i32_0 = arith.constant 0 : i32
    %c0_i32_1 = arith.constant 0 : i32
    return %c0_i32, %c0_i32_0 : i32, i32
  }
  func.func @transform_4(%arg0: i32) -> (i32, i32) {
    %c0_i32 = arith.constant 0 : i32
    %c0_i32_0 = arith.constant 0 : i32
    %c0_i32_1 = arith.constant 0 : i32
    return %c0_i32, %c0_i32_0 : i32, i32
  }
  func.func @transform_5(%arg0: i32) -> (i32, i32) {
    %c0_i32 = arith.constant 0 : i32
    %c0_i32_0 = arith.constant 0 : i32
    %c0_i32_1 = arith.constant 0 : i32
    return %c0_i32, %c0_i32_0 : i32, i32
  }
  func.func @transform_6(%arg0: i32) -> (i32, i32) {
    %c0_i32 = arith.constant 0 : i32
    %c0_i32_0 = arith.constant 0 : i32
    %c0_i32_1 = arith.constant 0 : i32
    return %c0_i32, %c0_i32_0 : i32, i32
  }
  func.func @transform_7(%arg0: i32) -> (i32, i32) {
    %c0_i32 = arith.constant 0 : i32
    %c0_i32_0 = arith.constant 0 : i32
    %c0_i32_1 = arith.constant 0 : i32
    return %c0_i32, %c0_i32_0 : i32, i32
  }
  func.func @transform_8(%arg0: i32) -> (i32, i32, i32) {
    %c0_i32 = arith.constant 0 : i32
    %c0_i32_0 = arith.constant 0 : i32
    %c0_i32_1 = arith.constant 0 : i32
    %c0_i32_2 = arith.constant 0 : i32
    return %c0_i32, %c0_i32_0, %c0_i32_1 : i32, i32, i32
  }
  func.func @transform_9(%arg0: i32) -> (i32, i32) {
    %c0_i32 = arith.constant 0 : i32
    %c0_i32_0 = arith.constant 0 : i32
    %c0_i32_1 = arith.constant 0 : i32
    return %c0_i32, %c0_i32_0 : i32, i32
  }
  func.func @transform_10(%arg0: i32) -> (i32, i32, i32, i32) {
    %c0_i32 = arith.constant 0 : i32
    %c0_i32_0 = arith.constant 0 : i32
    %c0_i32_1 = arith.constant 0 : i32
    %c0_i32_2 = arith.constant 0 : i32
    return %arg0, %c0_i32, %c0_i32_0, %c0_i32_1 : i32, i32, i32, i32
  }
}

</mosaic_0001>

<llo_original>
// kernel: tpu_custom_call.1
$region0: #{tpu_custom_call.1}
  #allocation0 [shape = 'u32[]', space=smem, size = 0x4, offset = 0x4, fixed_abs, tag = 'smem constant byte address 0x4 - core index']
  #allocation1 [shape = 'u32[144,128]{1,0:T(1,128)}', space=vmem, size = 0x12000, scoped, tag = 'internal scratch']
  #allocation2 [shape = 'f32[10,10,128]{2,1,0:T(8,128)}', space=vmem, size = 0x14000, scoped, tag = 'scratch operand']
  %s0 = inlined_call_operand.vmem [shape: f32[2,64,128], index: 0, kind: input, shape index: {}]
  %s1 = inlined_call_operand.hbm [shape: f32[2,64,128], index: 1, kind: input, shape index: {}]
  %s2 = inlined_call_operand.hbm [shape: f32[128,128], index: 2, kind: input, shape index: {}]
  %s3 = inlined_call_operand.vmem [shape: f32[1,128], index: 3, kind: input, shape index: {}]
  %s4 = inlined_call_operand.vmem [shape: f32[1,128], index: 4, kind: input, shape index: {}]
  %s5 = inlined_call_operand.vmem [shape: f32[1,128], index: 5, kind: input, shape index: {}]
  %s6 = inlined_call_operand.vmem [shape: f32[128,8], index: 6, kind: input, shape index: {}]
  %s7 = inlined_call_operand.vmem [shape: f32[8,128], index: 7, kind: input, shape index: {}]
  %s8 = inlined_call_operand.hbm [shape: f32[9,128,128], index: 8, kind: input, shape index: {}]
  %s9 = inlined_call_operand.vmem [shape: f32[1,128], index: 9, kind: input, shape index: {}]
  %s10 = inlined_call_operand.hbm [shape: f32[2,8,8,128], index: 10, kind: output, shape index: {}]
  %s11 = sld [smem:[#allocation0]]
  $region85: #{tpu_custom_call.1} parent=0
    _
  %s13 = ssub.s32 1, %s11
  %s14 = scalar_select 0, %s13, %s11
  $region1: #{tpu_custom_call.1} parent=0
    #allocation3 [shape = 'u8[65536]{0}', space=vmem, size = 0x10000, scoped, tag = 'input window, operand 1']
    #allocation4 [shape = 's32[2]{0}', space=sflag, size = 0x8, scoped, tag = 'scoped memory for tpu_custom_call.1']
    #allocation5 [shape = 's32[2]{0}', space=sflag, size = 0x8, scoped, tag = 'scoped memory for tpu_custom_call.1']
    #allocation6 [shape = 'u8[65536]{0}', space=vmem, size = 0x10000, scoped, tag = 'input window, operand 2, single buffered']
    #allocation7 [shape = 's32[1]{0}', space=sflag, size = 0x4, scoped, tag = 'scoped memory for tpu_custom_call.1']
    #allocation8 [shape = 'u8[589824]{0}', space=vmem, size = 0x90000, scoped, tag = 'input window, operand 8, single buffered']
    #allocation9 [shape = 'u8[65536]{0}', space=vmem, size = 0x10000, scoped, tag = 'output window, operand 0']
    %15 = vsyncpa [#allocation4], 0
    %s16 = scalar_lea.sflag [#allocation4], 1
    %17 = vsyncpa %s16, 0
    %18 = vsyncpa [#allocation7], 0
    %19 = vsyncpa [#allocation5], 0
    %s20 = scalar_lea.sflag [#allocation5], 1
    %21 = vsyncpa %s20, 0
    loop: start=0, step=1, limit=4
    $region2: #{tpu_custom_call.1} parent=1 // loop_pre_header
      _
    $region3: #{tpu_custom_call.1} parent=1 // loop_header
      %s23 = sphi 0, %s27
      %p24 = scmp.ge.s32.totalorder %s23, 4
      %s33 = sphi 0, %s35
      %s36 = sphi 0, %s33
      %s37 = sphi 0, %s36
      %s53 = sphi 0, %s37
      %s59 = sphi 0, %s61
      %s62 = sphi 0, %s59
      %s63 = sphi 0, %s62
      %s79 = sphi 0, %s63
      %s83 = sphi 0, %s83
      %s85 = sphi 0, %s83
      %s86 = sphi 0, %s85
      %s100 = sphi 0, %s86
      %s104 = sphi 0, %s104
      %s106 = sphi 0, %s104
      %s107 = sphi 0, %s106
      %s121 = sphi 0, %s107
      %s125 = sphi 0, %s125
      %s127 = sphi 0, %s125
      %s128 = sphi 0, %s127
      %s142 = sphi 0, %s128
      %s146 = sphi 0, %s146
      %s148 = sphi 0, %s146
      %s149 = sphi 0, %s148
      %s163 = sphi 0, %s149
      %s167 = sphi 0, %s167
      %s169 = sphi 0, %s167
      %s170 = sphi 0, %s169
      %s184 = sphi 0, %s170
      %s188 = sphi 0, %s188
      %s190 = sphi 0, %s188
      %s191 = sphi 0, %s190
      %s205 = sphi 0, %s191
      %s209 = sphi 0, %s209
      %s211 = sphi 0, %s209
      %s212 = sphi 0, %s211
      %s226 = sphi 0, %s212
      %s230 = sphi 0, %s230
      %s232 = sphi 0, %s230
      %s233 = sphi 0, %s232
      %s247 = sphi 0, %s233
      %s253 = sphi 0, %s255
      %s256 = sphi 0, %s253
      %s257 = sphi 0, %s256
      %s273 = sphi 0, %s257
    $region4: #{tpu_custom_call.1} parent=1 // loop_header_branch
      %26 = sbr.rel (%p24) target = $region8
    $region5: #{tpu_custom_call.1} parent=1 // loop_body
      %s28 = ssub.s32 %s23, 1
      %s29 = ssub.s32 %s23, 2
      %s30 = sadd.s32 %s23, 1
      %s31 = ssub.s32 %s23, %s30
      %p32 = scmp.eq.s32.totalorder %s31, 0
      %s34 = sadd.s32 %s33, 1
      %s35 = scalar_select %p32, %s33, %s34
      %p38 = pneg %p32
      %p39 = scmp.eq.s32.totalorder %s23, 1
      %p40 = por %p38, %p39
      %p41 = scmp.ne.s32.totalorder %s33, %s36
      %p42 = scmp.eq.s32.totalorder %s23, 0
      %p43 = por %p41, %p42
      %p44 = scmp.ne.s32.totalorder %s33, %s36
      %p45 = scmp.eq.s32.totalorder %s28, 1
      %p46 = por %p44, %p45
      %p47 = scmp.ne.s32.totalorder %s36, %s37
      %p48 = scmp.eq.s32.totalorder %s28, 0
      %p49 = por %p47, %p48
      %p50 = scmp.ne.s32.totalorder %s36, %s37
      %p51 = scmp.eq.s32.totalorder %s29, 1
      %p52 = por %p50, %p51
      %p54 = scmp.ne.s32.totalorder %s37, %s53
      %p55 = scmp.eq.s32.totalorder %s29, 0
      %p56 = por %p54, %p55
      %s57 = ssub.s32 %s23, %s30
      %p58 = scmp.eq.s32.totalorder %s57, 0
      %s60 = sadd.s32 %s59, 1
      %s61 = scalar_select %p58, %s59, %s60
      %p64 = pneg %p58
      %p65 = scmp.eq.s32.totalorder %s23, 1
      %p66 = por %p64, %p65
      %p67 = scmp.ne.s32.totalorder %s59, %s62
      %p68 = scmp.eq.s32.totalorder %s23, 0
      %p69 = por %p67, %p68
      %p70 = scmp.ne.s32.totalorder %s59, %s62
      %p71 = scmp.eq.s32.totalorder %s28, 1
      %p72 = por %p70, %p71
      %p73 = scmp.ne.s32.totalorder %s62, %s63
      %p74 = scmp.eq.s32.totalorder %s28, 0
      %p75 = por %p73, %p74
      %p76 = scmp.ne.s32.totalorder %s62, %s63
      %p77 = scmp.eq.s32.totalorder %s29, 1
      %p78 = por %p76, %p77
      %p80 = scmp.ne.s32.totalorder %s63, %s79
      %p81 = scmp.eq.s32.totalorder %s29, 0
      %p82 = por %p80, %p81
      %s84 = sadd.s32 %s83, 1
      %p87 = scmp.eq.s32.totalorder %s23, 1
      %p88 = scmp.ne.s32.totalorder %s83, %s85
      %p89 = scmp.eq.s32.totalorder %s23, 0
      %p90 = por %p88, %p89
      %p91 = scmp.ne.s32.totalorder %s83, %s85
      %p92 = scmp.eq.s32.totalorder %s28, 1
      %p93 = por %p91, %p92
      %p94 = scmp.ne.s32.totalorder %s85, %s86
      %p95 = scmp.eq.s32.totalorder %s28, 0
      %p96 = por %p94, %p95
      %p97 = scmp.ne.s32.totalorder %s85, %s86
      %p98 = scmp.eq.s32.totalorder %s29, 1
      %p99 = por %p97, %p98
      %p101 = scmp.ne.s32.totalorder %s86, %s100
      %p102 = scmp.eq.s32.totalorder %s29, 0
      %p103 = por %p101, %p102
      %s105 = sadd.s32 %s104, 1
      %p108 = scmp.eq.s32.totalorder %s23, 1
      %p109 = scmp.ne.s32.totalorder %s104, %s106
      %p110 = scmp.eq.s32.totalorder %s23, 0
      %p111 = por %p109, %p110
      %p112 = scmp.ne.s32.totalorder %s104, %s106
      %p113 = scmp.eq.s32.totalorder %s28, 1
      %p114 = por %p112, %p113
      %p115 = scmp.ne.s32.totalorder %s106, %s107
      %p116 = scmp.eq.s32.totalorder %s28, 0
      %p117 = por %p115, %p116
      %p118 = scmp.ne.s32.totalorder %s106, %s107
      %p119 = scmp.eq.s32.totalorder %s29, 1
      %p120 = por %p118, %p119
      %p122 = scmp.ne.s32.totalorder %s107, %s121
      %p123 = scmp.eq.s32.totalorder %s29, 0
      %p124 = por %p122, %p123
      %s126 = sadd.s32 %s125, 1
      %p129 = scmp.eq.s32.totalorder %s23, 1
      %p130 = scmp.ne.s32.totalorder %s125, %s127
      %p131 = scmp.eq.s32.totalorder %s23, 0
      %p132 = por %p130, %p131
      %p133 = scmp.ne.s32.totalorder %s125, %s127
      %p134 = scmp.eq.s32.totalorder %s28, 1
      %p135 = por %p133, %p134
      %p136 = scmp.ne.s32.totalorder %s127, %s128
      %p137 = scmp.eq.s32.totalorder %s28, 0
      %p138 = por %p136, %p137
      %p139 = scmp.ne.s32.totalorder %s127, %s128
      %p140 = scmp.eq.s32.totalorder %s29, 1
      %p141 = por %p139, %p140
      %p143 = scmp.ne.s32.totalorder %s128, %s142
      %p144 = scmp.eq.s32.totalorder %s29, 0
      %p145 = por %p143, %p144
      %s147 = sadd.s32 %s146, 1
      %p150 = scmp.eq.s32.totalorder %s23, 1
      %p151 = scmp.ne.s32.totalorder %s146, %s148
      %p152 = scmp.eq.s32.totalorder %s23, 0
      %p153 = por %p151, %p152
      %p154 = scmp.ne.s32.totalorder %s146, %s148
      %p155 = scmp.eq.s32.totalorder %s28, 1
      %p156 = por %p154, %p155
      %p157 = scmp.ne.s32.totalorder %s148, %s149
      %p158 = scmp.eq.s32.totalorder %s28, 0
      %p159 = por %p157, %p158
      %p160 = scmp.ne.s32.totalorder %s148, %s149
      %p161 = scmp.eq.s32.totalorder %s29, 1
      %p162 = por %p160, %p161
      %p164 = scmp.ne.s32.totalorder %s149, %s163
      %p165 = scmp.eq.s32.totalorder %s29, 0
      %p166 = por %p164, %p165
      %s168 = sadd.s32 %s167, 1
      %p171 = scmp.eq.s32.totalorder %s23, 1
      %p172 = scmp.ne.s32.totalorder %s167, %s169
      %p173 = scmp.eq.s32.totalorder %s23, 0
      %p174 = por %p172, %p173
      %p175 = scmp.ne.s32.totalorder %s167, %s169
      %p176 = scmp.eq.s32.totalorder %s28, 1
      %p177 = por %p175, %p176
      %p178 = scmp.ne.s32.totalorder %s169, %s170
      %p179 = scmp.eq.s32.totalorder %s28, 0
      %p180 = por %p178, %p179
      %p181 = scmp.ne.s32.totalorder %s169, %s170
      %p182 = scmp.eq.s32.totalorder %s29, 1
      %p183 = por %p181, %p182
      %p185 = scmp.ne.s32.totalorder %s170, %s184
      %p186 = scmp.eq.s32.totalorder %s29, 0
      %p187 = por %p185, %p186
      %s189 = sadd.s32 %s188, 1
      %p192 = scmp.eq.s32.totalorder %s23, 1
      %p193 = scmp.ne.s32.totalorder %s188, %s190
      %p194 = scmp.eq.s32.totalorder %s23, 0
      %p195 = por %p193, %p194
      %p196 = scmp.ne.s32.totalorder %s188, %s190
      %p197 = scmp.eq.s32.totalorder %s28, 1
      %p198 = por %p196, %p197
      %p199 = scmp.ne.s32.totalorder %s190, %s191
      %p200 = scmp.eq.s32.totalorder %s28, 0
      %p201 = por %p199, %p200
      %p202 = scmp.ne.s32.totalorder %s190, %s191
      %p203 = scmp.eq.s32.totalorder %s29, 1
      %p204 = por %p202, %p203
      %p206 = scmp.ne.s32.totalorder %s191, %s205
      %p207 = scmp.eq.s32.totalorder %s29, 0
      %p208 = por %p206, %p207
      %s210 = sadd.s32 %s209, 1
      %p213 = scmp.eq.s32.totalorder %s23, 1
      %p214 = scmp.ne.s32.totalorder %s209, %s211
      %p215 = scmp.eq.s32.totalorder %s23, 0
      %p216 = por %p214, %p215
      %p217 = scmp.ne.s32.totalorder %s209, %s211
      %p218 = scmp.eq.s32.totalorder %s28, 1
      %p219 = por %p217, %p218
      %p220 = scmp.ne.s32.totalorder %s211, %s212
      %p221 = scmp.eq.s32.totalorder %s28, 0
      %p222 = por %p220, %p221
      %p223 = scmp.ne.s32.totalorder %s211, %s212
      %p224 = scmp.eq.s32.totalorder %s29, 1
      %p225 = por %p223, %p224
      %p227 = scmp.ne.s32.totalorder %s212, %s226
      %p228 = scmp.eq.s32.totalorder %s29, 0
      %p229 = por %p227, %p228
      %s231 = sadd.s32 %s230, 1
      %p234 = scmp.eq.s32.totalorder %s23, 1
      %p235 = scmp.ne.s32.totalorder %s230, %s232
      %p236 = scmp.eq.s32.totalorder %s23, 0
      %p237 = por %p235, %p236
      %p238 = scmp.ne.s32.totalorder %s230, %s232
      %p239 = scmp.eq.s32.totalorder %s28, 1
      %p240 = por %p238, %p239
      %p241 = scmp.ne.s32.totalorder %s232, %s233
      %p242 = scmp.eq.s32.totalorder %s28, 0
      %p243 = por %p241, %p242
      %p244 = scmp.ne.s32.totalorder %s232, %s233
      %p245 = scmp.eq.s32.totalorder %s29, 1
      %p246 = por %p244, %p245
      %p248 = scmp.ne.s32.totalorder %s233, %s247
      %p249 = scmp.eq.s32.totalorder %s29, 0
      %p250 = por %p248, %p249
      %s251 = ssub.s32 %s23, %s30
      %p252 = scmp.eq.s32.totalorder %s251, 0
      %s254 = sadd.s32 %s253, 1
      %s255 = scalar_select %p252, %s253, %s254
      %p258 = pneg %p252
      %p259 = scmp.eq.s32.totalorder %s23, 1
      %p260 = por %p258, %p259
      %p261 = scmp.ne.s32.totalorder %s253, %s256
      %p262 = scmp.eq.s32.totalorder %s23, 0
      %p263 = por %p261, %p262
      %p264 = scmp.ne.s32.totalorder %s253, %s256
      %p265 = scmp.eq.s32.totalorder %s28, 1
      %p266 = por %p264, %p265
      %p267 = scmp.ne.s32.totalorder %s256, %s257
      %p268 = scmp.eq.s32.totalorder %s28, 0
      %p269 = por %p267, %p268
      %p270 = scmp.ne.s32.totalorder %s256, %s257
      %p271 = scmp.eq.s32.totalorder %s29, 1
      %p272 = por %p270, %p271
      %p274 = scmp.ne.s32.totalorder %s257, %s273
      %p275 = scmp.eq.s32.totalorder %s29, 0
      %p276 = por %p274, %p275
      %p277 = scmp.le.s32.totalorder 1, %s23
      %p278 = scmp.lt.s32.totalorder %s23, 3
      %p279 = pnand %p277, %p278
      %p280 = pneg %p279
      // Predicated region
      $region9: #{tpu_custom_call.1} parent=5 // pred_check
        _
      $region10: #{tpu_custom_call.1} parent=5 // pred_check_branch
        %282 = sbr.rel (%p279) target = $region12
      $region11: #{tpu_custom_call.1} parent=5 // pred_region
        %s283 = ssub.s32 %s23, 1
        // Predicated region
        $region13: #{tpu_custom_call.1} parent=11 // pred_check
          %p284 = pneg %p96
        $region14: #{tpu_custom_call.1} parent=11 // pred_check_branch
          %286 = sbr.rel (%p284) target = $region16
        $region15: #{tpu_custom_call.1} parent=11 // pred_region
          %s288 = ssub.s32 2048, 2048
          %289 = vsyncadd [#allocation7], %s288
          %s290 = sshll.u32 [#allocation6], 4
          %s291 = int_to_ptr.vmem [resolvable:$true] %s290
          %296 = dma.hbm_to_vmem [thread:$0]  %s2, 2048, %s291, [#allocation7], 128, 128, 8
        $region16: #{tpu_custom_call.1} parent=11 // pred_fallthru
          _
        // Predicated region
        $region17: #{tpu_custom_call.1} parent=11 // pred_check
          %p297 = pneg %p117
        $region18: #{tpu_custom_call.1} parent=11 // pred_check_branch
          %299 = sbr.rel (%p297) target = $region20
        $region19: #{tpu_custom_call.1} parent=11 // pred_region
          _
        $region20: #{tpu_custom_call.1} parent=11 // pred_fallthru
          _
        // Predicated region
        $region21: #{tpu_custom_call.1} parent=11 // pred_check
          %p300 = pneg %p138
        $region22: #{tpu_custom_call.1} parent=11 // pred_check_branch
          %302 = sbr.rel (%p300) target = $region24
        $region23: #{tpu_custom_call.1} parent=11 // pred_region
          _
        $region24: #{tpu_custom_call.1} parent=11 // pred_fallthru
          _
        // Predicated region
        $region25: #{tpu_custom_call.1} parent=11 // pred_check
          %p303 = pneg %p159
        $region26: #{tpu_custom_call.1} parent=11 // pred_check_branch
          %305 = sbr.rel (%p303) target = $region28
        $region27: #{tpu_custom_call.1} parent=11 // pred_region
          _
        $region28: #{tpu_custom_call.1} parent=11 // pred_fallthru
          _
        // Predicated region
        $region29: #{tpu_custom_call.1} parent=11 // pred_check
          %p306 = pneg %p180
        $region30: #{tpu_custom_call.1} parent=11 // pred_check_branch
          %308 = sbr.rel (%p306) target = $region32
        $region31: #{tpu_custom_call.1} parent=11 // pred_region
          _
        $region32: #{tpu_custom_call.1} parent=11 // pred_fallthru
          _
        // Predicated region
        $region33: #{tpu_custom_call.1} parent=11 // pred_check
          %p309 = pneg %p201
        $region34: #{tpu_custom_call.1} parent=11 // pred_check_branch
          %311 = sbr.rel (%p309) target = $region36
        $region35: #{tpu_custom_call.1} parent=11 // pred_region
          _
        $region36: #{tpu_custom_call.1} parent=11 // pred_fallthru
          _
        // Predicated region
        $region37: #{tpu_custom_call.1} parent=11 // pred_check
          %p312 = pneg %p222
        $region38: #{tpu_custom_call.1} parent=11 // pred_check_branch
          %314 = sbr.rel (%p312) target = $region40
        $region39: #{tpu_custom_call.1} parent=11 // pred_region
          %s316 = ssub.s32 18432, 18432
          %317 = vsyncadd [#allocation7], %s316
          %s318 = sshll.u32 [#allocation8], 4
          %s319 = int_to_ptr.vmem [resolvable:$true] %s318
          %324 = dma.hbm_to_vmem [thread:$0]  %s8, 18432, %s319, [#allocation7], 128, 128, 8
        $region40: #{tpu_custom_call.1} parent=11 // pred_fallthru
          _
        // Predicated region
        $region41: #{tpu_custom_call.1} parent=11 // pred_check
          %p325 = pneg %p243
        $region42: #{tpu_custom_call.1} parent=11 // pred_check_branch
          %327 = sbr.rel (%p325) target = $region44
        $region43: #{tpu_custom_call.1} parent=11 // pred_region
          _
        $region44: #{tpu_custom_call.1} parent=11 // pred_fallthru
          _
      $region12: #{tpu_custom_call.1} parent=5 // pred_fallthru
        _
      %p328 = scmp.lt.s32.totalorder %s23, 2
      // Predicated region
      $region45: #{tpu_custom_call.1} parent=5 // pred_check
        %p329 = pneg %p328
      $region46: #{tpu_custom_call.1} parent=5 // pred_check_branch
        %331 = sbr.rel (%p329) target = $region48
      $region47: #{tpu_custom_call.1} parent=5 // pred_region
        // Predicated region
        $region49: #{tpu_custom_call.1} parent=47 // pred_check
          %p332 = pneg %p43
        $region50: #{tpu_custom_call.1} parent=47 // pred_check_branch
          %334 = sbr.rel (%p332) target = $region52
        $region51: #{tpu_custom_call.1} parent=47 // pred_region
          %p335 = scmp.lt.s32.totalorder %s23, 1
          %s336 = scalar_select %p335, %s23, 1
          %s337 = smul.addr %s336, 8
          %s338 = smul.addr %s337, 8
          %s339 = scalar_lea.vmem %s0, %s338
        $region52: #{tpu_custom_call.1} parent=47 // pred_fallthru
          _
        // Predicated region
        $region53: #{tpu_custom_call.1} parent=47 // pred_check
          %p340 = pneg %p69
        $region54: #{tpu_custom_call.1} parent=47 // pred_check_branch
          %342 = sbr.rel (%p340) target = $region56
        $region55: #{tpu_custom_call.1} parent=47 // pred_region
          %s343 = sand.u32 %s59, 1
          %s344 = scalar_lea.sflag [#allocation4], %s343
          %s345 = sand.u32 %s59, 1
          %s346 = smul.addr %s345, 64
          %s347 = scalar_lea.vmem [#allocation3], %s346
          %s349 = ssub.s32 1024, 1024
          %350 = vsyncadd %s344, %s349
          %s351 = smul.addr %s23, 8
          %s352 = smul.addr %s351, 128
          %s353 = scalar_lea.hbm %s1, %s352
          %s354 = sshll.u32 %s347, 4
          %s355 = int_to_ptr.vmem [resolvable:$true] %s354
          %360 = dma.hbm_to_vmem [thread:$0]  %s353, 1024, %s355, %s344, 128, 128, 8
        $region56: #{tpu_custom_call.1} parent=47 // pred_fallthru
          _
      $region48: #{tpu_custom_call.1} parent=5 // pred_fallthru
        _
      %p361 = scmp.le.s32.totalorder 1, %s23
      %p362 = scmp.lt.s32.totalorder %s23, 3
      %p363 = pnand %p361, %p362
      %p364 = pneg %p363
      // Predicated region
      $region57: #{tpu_custom_call.1} parent=5 // pred_check
        _
      $region58: #{tpu_custom_call.1} parent=5 // pred_check_branch
        %366 = sbr.rel (%p363) target = $region60
      $region59: #{tpu_custom_call.1} parent=5 // pred_region
        %s367 = ssub.s32 %s23, 1
        %s368 = sand.u32 %s62, 1
        %s369 = scalar_lea.sflag [#allocation4], %s368
        %s370 = sand.u32 %s62, 1
        %s371 = smul.addr %s370, 64
        %s372 = scalar_lea.vmem [#allocation3], %s371
        // Predicated region
        $region61: #{tpu_custom_call.1} parent=59 // pred_check
          %p373 = pneg %p75
        $region62: #{tpu_custom_call.1} parent=59 // pred_check_branch
          %375 = sbr.rel (%p373) target = $region64
        $region63: #{tpu_custom_call.1} parent=59 // pred_region
          %376 = dma.done %s369, 1024
        $region64: #{tpu_custom_call.1} parent=59 // pred_fallthru
          _
        // Predicated region
        $region65: #{tpu_custom_call.1} parent=59 // pred_check
          %p377 = pneg %p96
        $region66: #{tpu_custom_call.1} parent=59 // pred_check_branch
          %379 = sbr.rel (%p377) target = $region68
        $region67: #{tpu_custom_call.1} parent=59 // pred_region
          %380 = dma.done [#allocation7], 2048
        $region68: #{tpu_custom_call.1} parent=59 // pred_fallthru
          _
        // Predicated region
        $region69: #{tpu_custom_call.1} parent=59 // pred_check
          %p381 = pneg %p222
        $region70: #{tpu_custom_call.1} parent=59 // pred_check_branch
          %383 = sbr.rel (%p381) target = $region72
        $region71: #{tpu_custom_call.1} parent=59 // pred_region
          %384 = dma.done [#allocation7], 18432
        $region72: #{tpu_custom_call.1} parent=59 // pred_fallthru
          _
        %p385 = scmp.lt.s32.totalorder %s28, 1
        %s386 = scalar_select %p385, %s28, 1
        %s387 = smul.addr %s386, 8
        %s388 = smul.addr %s387, 8
        %s389 = scalar_lea.vmem %s0, %s388
        %p390 = pneg %p49
        %p391 = pneg %p46
        %s392 = sand.u32 %s62, 1
        %s393 = scalar_lea.sflag [#allocation4], %s392
        %s394 = sand.u32 %s62, 1
        %s395 = smul.addr %s394, 64
        %s396 = scalar_lea.vmem [#allocation3], %s395
        %p397 = pneg %p75
        %p398 = pneg %p72
        %p399 = pneg %p96
        %p400 = pneg %p93
        %p401 = pneg %p117
        %p402 = pneg %p114
        %p403 = pneg %p138
        %p404 = pneg %p135
        %p405 = pneg %p159
        %p406 = pneg %p156
        %p407 = pneg %p180
        %p408 = pneg %p177
        %p409 = pneg %p201
        %p410 = pneg %p198
        %p411 = pneg %p222
        %p412 = pneg %p219
        %p413 = pneg %p243
        %p414 = pneg %p240
        %p415 = pneg %p269
        %p416 = pneg %p266
        %s417 = sand.u32 %s256, 1
        %s418 = scalar_lea.sflag [#allocation5], %s417
        %s419 = sand.u32 %s256, 1
        %s420 = smul.addr %s419, 64
        %s421 = scalar_lea.vmem [#allocation9], %s420
        %p422 = scmp.lt.s32.totalorder %s28, 1
        %s423 = scalar_select %p422, %s28, 1
        %s424 = smul.addr %s423, 8
        %s425 = smul.addr %s424, 8
        %s426 = scalar_lea.vmem %s0, %s425
        %v427 = vld [vmem:[%s426] sm:$0xff]
        %v428 = vld [vmem:[%s426 + $0x8] sm:$0xff]
        %v429 = vld [vmem:[%s426 + $0x10] sm:$0xff]
        %v430 = vld [vmem:[%s426 + $0x18] sm:$0xff]
        %v431 = vld [vmem:[%s426 + $0x20] sm:$0xff]
        %v432 = vld [vmem:[%s426 + $0x28] sm:$0xff]
        %v433 = vld [vmem:[%s426 + $0x30] sm:$0xff]
        %v434 = vld [vmem:[%s426 + $0x38] sm:$0xff]
        %v435 = vld [vmem:[%s372] sm:$0xff]
        %v436 = vld [vmem:[%s372 + $0x8] sm:$0xff]
        %v437 = vld [vmem:[%s372 + $0x10] sm:$0xff]
        %v438 = vld [vmem:[%s372 + $0x18] sm:$0xff]
        %v439 = vld [vmem:[%s372 + $0x20] sm:$0xff]
        %v440 = vld [vmem:[%s372 + $0x28] sm:$0xff]
        %v441 = vld [vmem:[%s372 + $0x30] sm:$0xff]
        %v442 = vld [vmem:[%s372 + $0x38] sm:$0xff]
        %v443 = vld [vmem:[#allocation6] sm:$0xff]
        %v444 = vld [vmem:[#allocation6 + $0x8] sm:$0xff]
        %v445 = vld [vmem:[#allocation6 + $0x10] sm:$0xff]
        %v446 = vld [vmem:[#allocation6 + $0x18] sm:$0xff]
        %v447 = vld [vmem:[#allocation6 + $0x20] sm:$0xff]
        %v448 = vld [vmem:[#allocation6 + $0x28] sm:$0xff]
        %v449 = vld [vmem:[#allocation6 + $0x30] sm:$0xff]
        %v450 = vld [vmem:[#allocation6 + $0x38] sm:$0xff]
        %v451 = vld [vmem:[#allocation6 + $0x40] sm:$0xff]
        %v452 = vld [vmem:[#allocation6 + $0x48] sm:$0xff]
        %v453 = vld [vmem:[#allocation6 + $0x50] sm:$0xff]
        %v454 = vld [vmem:[#allocation6 + $0x58] sm:$0xff]
        %v455 = vld [vmem:[#allocation6 + $0x60] sm:$0xff]
        %v456 = vld [vmem:[#allocation6 + $0x68] sm:$0xff]
        %v457 = vld [vmem:[#allocation6 + $0x70] sm:$0xff]
        %v458 = vld [vmem:[#allocation6 + $0x78] sm:$0xff]
        %459 = vmatprep.subr.mxu0 0.0
        %460 = vmatpush1.msra.mxu0 %v443
        %461 = vmatprep.subr.mxu0 0.0
        %462 = vmatpush1.msra.mxu0 %v444
        %463 = vmatprep.subr.mxu0 0.0
        %464 = vmatpush1.msra.mxu0 %v445
        %465 = vmatprep.subr.mxu0 0.0
        %466 = vmatpush1.msra.mxu0 %v446
        %467 = vmatprep.subr.mxu0 0.0
        %468 = vmatpush1.msra.mxu0 %v447
        %469 = vmatprep.subr.mxu0 0.0
        %470 = vmatpush1.msra.mxu0 %v448
        %471 = vmatprep.subr.mxu0 0.0
        %472 = vmatpush1.msra.mxu0 %v449
        %473 = vmatprep.subr.mxu0 0.0
        %474 = vmatpush1.msra.mxu0 %v450
        %475 = vmatprep.subr.mxu0 0.0
        %476 = vmatpush1.msra.mxu0 %v451
        %477 = vmatprep.subr.mxu0 0.0
        %478 = vmatpush1.msra.mxu0 %v452
        %479 = vmatprep.subr.mxu0 0.0
        %480 = vmatpush1.msra.mxu0 %v453
        %481 = vmatprep.subr.mxu0 0.0
        %482 = vmatpush1.msra.mxu0 %v454
        %483 = vmatprep.subr.mxu0 0.0
        %484 = vmatpush1.msra.mxu0 %v455
        %485 = vmatprep.subr.mxu0 0.0
        %486 = vmatpush1.msra.mxu0 %v456
        %487 = vmatprep.subr.mxu0 0.0
        %488 = vmatpush1.msra.mxu0 %v457
        %489 = vmatprep.subr.mxu0 0.0
        %490 = vmatpush1.msra.mxu0 %v458
        %491 = vmatprep.subr.mxu0 0.0
        %492 = vmatpush1.msra.mxu0 0.0
        %493 = vmatprep.subr.mxu0 0.0
        %494 = vmatpush1.msra.mxu0 0.0
        %495 = vmatprep.subr.mxu0 0.0
        %496 = vmatpush1.msra.mxu0 0.0
        %497 = vmatprep.subr.mxu0 0.0
        %498 = vmatpush1.msra.mxu0 0.0
        %499 = vmatprep.subr.mxu0 0.0
        %500 = vmatpush1.msra.mxu0 0.0
        %501 = vmatprep.subr.mxu0 0.0
        %502 = vmatpush1.msra.mxu0 0.0
        %503 = vmatprep.subr.mxu0 0.0
        %504 = vmatpush1.msra.mxu0 0.0
        %505 = vmatprep.subr.mxu0 0.0
        %506 = vmatpush1.msra.mxu0 0.0
        %507 = vmatprep.subr.mxu0 0.0
        %508 = vmatpush1.msra.mxu0 0.0
        %509 = vmatprep.subr.mxu0 0.0
        %510 = vmatpush1.msra.mxu0 0.0
        %511 = vmatprep.subr.mxu0 0.0
        %512 = vmatpush1.msra.mxu0 0.0
        %513 = vmatprep.subr.mxu0 0.0
        %514 = vmatpush1.msra.mxu0 0.0
        %515 = vmatprep.subr.mxu0 0.0
        %516 = vmatpush1.msra.mxu0 0.0
        %517 = vmatprep.subr.mxu0 0.0
        %518 = vmatpush1.msra.mxu0 0.0
        %519 = vmatprep.subr.mxu0 0.0
        %520 = vmatpush1.msra.mxu0 0.0
        %521 = vmatprep.subr.mxu0 0.0
        %522 = vmatpush1.msra.mxu0 0.0
        %523 = vmatprep.mubr.f32.mxu0 0.0
        %524 = vmatmul.mubr.f32.gmra.mrb[0].mxu0 %v435
        %v525 = vpop.f32.mrb[0].mxu0
        %v526 = vadd.f32 0.0, %v525
        %v527 = vpop.f32.mrb[0].mxu0
        %528 = vmatprep.mubr.f32.mxu0 0.0
        %529 = vmatmul.mubr.f32.gmra.mrb[0].mxu0 %v436
        %v530 = vpop.f32.mrb[0].mxu0
        %v531 = vadd.f32 0.0, %v530
        %v532 = vpop.f32.mrb[0].mxu0
        %533 = vmatprep.mubr.f32.mxu0 0.0
        %534 = vmatmul.mubr.f32.gmra.mrb[0].mxu0 %v437
        %v535 = vpop.f32.mrb[0].mxu0
        %v536 = vadd.f32 0.0, %v535
        %v537 = vpop.f32.mrb[0].mxu0
        %538 = vmatprep.mubr.f32.mxu0 0.0
        %539 = vmatmul.mubr.f32.gmra.mrb[0].mxu0 %v438
        %v540 = vpop.f32.mrb[0].mxu0
        %v541 = vadd.f32 0.0, %v540
        %v542 = vpop.f32.mrb[0].mxu0
        %543 = vmatprep.mubr.f32.mxu0 0.0
        %544 = vmatmul.mubr.f32.gmra.mrb[0].mxu0 %v439
        %v545 = vpop.f32.mrb[0].mxu0
        %v546 = vadd.f32 0.0, %v545
        %v547 = vpop.f32.mrb[0].mxu0
        %548 = vmatprep.mubr.f32.mxu0 0.0
        %549 = vmatmul.mubr.f32.gmra.mrb[0].mxu0 %v440
        %v550 = vpop.f32.mrb[0].mxu0
        %v551 = vadd.f32 0.0, %v550
        %v552 = vpop.f32.mrb[0].mxu0
        %553 = vmatprep.mubr.f32.mxu0 0.0
        %554 = vmatmul.mubr.f32.gmra.mrb[0].mxu0 %v441
        %v555 = vpop.f32.mrb[0].mxu0
        %v556 = vadd.f32 0.0, %v555
        %v557 = vpop.f32.mrb[0].mxu0
        %558 = vmatprep.mubr.f32.mxu0 0.0
        %559 = vmatmul.mubr.f32.gmra.mrb[0].mxu0 %v442
        %v560 = vpop.f32.mrb[0].mxu0
        %v561 = vadd.f32 0.0, %v560
        %v562 = vpop.f32.mrb[0].mxu0
        %563 = vdwg.mxu0
        %v564 = vadd.f32 %v427, %v526
        %v565 = vadd.f32 %v428, %v531
        %v566 = vadd.f32 %v429, %v536
        %v567 = vadd.f32 %v430, %v541
        %v568 = vadd.f32 %v431, %v546
        %v569 = vadd.f32 %v432, %v551
        %v570 = vadd.f32 %v433, %v556
        %v571 = vadd.f32 %v434, %v561
        %v572 = vld [vmem:[%s3] sm:$0x1]
        %v574 = vlaneseq
        %v575 = vshrl.u32 %v574, 7
        %v576 = vsub.s32 0, %v575
        %v577 = vrot.slane %v572, %v576
        %v579 = vadd.f32 %v564, %v577
        %v580 = vadd.f32 %v565, %v577
        %v581 = vadd.f32 %v566, %v577
        %v582 = vadd.f32 %v567, %v577
        %v583 = vadd.f32 %v568, %v577
        %v584 = vadd.f32 %v569, %v577
        %v585 = vadd.f32 %v570, %v577
        %v586 = vadd.f32 %v571, %v577
        %v587 = vadd.f32 %v579, %v580
        %v588 = vadd.f32 %v587, %v581
        %v589 = vadd.f32 %v588, %v582
        %v590 = vadd.f32 %v589, %v583
        %v591 = vadd.f32 %v590, %v584
        %v592 = vadd.f32 %v591, %v585
        %v593 = vadd.f32 %v592, %v586
        %v594 = vrot.slane %v593, 4
        %v595 = vadd.f32 %v593, %v594
        %v596 = vrot.slane %v595, 2
        %v597 = vadd.f32 %v595, %v596
        %v598 = vrot.slane %v597, 1
        %v599 = vadd.f32 %v597, %v598
        %v600 = vld [vmem:[%s6] sm:$0xff]
        %v601 = vld [vmem:[%s6 + $0x8] sm:$0xff]
        %v602 = vld [vmem:[%s6 + $0x10] sm:$0xff]
        %v603 = vld [vmem:[%s6 + $0x18] sm:$0xff]
        %v604 = vld [vmem:[%s6 + $0x20] sm:$0xff]
        %v605 = vld [vmem:[%s6 + $0x28] sm:$0xff]
        %v606 = vld [vmem:[%s6 + $0x30] sm:$0xff]
        %v607 = vld [vmem:[%s6 + $0x38] sm:$0xff]
        %v608 = vld [vmem:[%s6 + $0x40] sm:$0xff]
        %v609 = vld [vmem:[%s6 + $0x48] sm:$0xff]
        %v610 = vld [vmem:[%s6 + $0x50] sm:$0xff]
        %v611 = vld [vmem:[%s6 + $0x58] sm:$0xff]
        %v612 = vld [vmem:[%s6 + $0x60] sm:$0xff]
        %v613 = vld [vmem:[%s6 + $0x68] sm:$0xff]
        %v614 = vld [vmem:[%s6 + $0x70] sm:$0xff]
        %v615 = vld [vmem:[%s6 + $0x78] sm:$0xff]
        %616 = vmatprep.subr.mxu0 0.0
        %617 = vmatpush1.msra.mxu0 %v600
        %618 = vmatprep.subr.mxu0 0.0
        %619 = vmatpush1.msra.mxu0 %v601
        %620 = vmatprep.subr.mxu0 0.0
        %621 = vmatpush1.msra.mxu0 %v602
        %622 = vmatprep.subr.mxu0 0.0
        %623 = vmatpush1.msra.mxu0 %v603
        %624 = vmatprep.subr.mxu0 0.0
        %625 = vmatpush1.msra.mxu0 %v604
        %626 = vmatprep.subr.mxu0 0.0
        %627 = vmatpush1.msra.mxu0 %v605
        %628 = vmatprep.subr.mxu0 0.0
        %629 = vmatpush1.msra.mxu0 %v606
        %630 = vmatprep.subr.mxu0 0.0
        %631 = vmatpush1.msra.mxu0 %v607
        %632 = vmatprep.subr.mxu0 0.0
        %633 = vmatpush1.msra.mxu0 %v608
        %634 = vmatprep.subr.mxu0 0.0
        %635 = vmatpush1.msra.mxu0 %v609
        %636 = vmatprep.subr.mxu0 0.0
        %637 = vmatpush1.msra.mxu0 %v610
        %638 = vmatprep.subr.mxu0 0.0
        %639 = vmatpush1.msra.mxu0 %v611
        %640 = vmatprep.subr.mxu0 0.0
        %641 = vmatpush1.msra.mxu0 %v612
        %642 = vmatprep.subr.mxu0 0.0
        %643 = vmatpush1.msra.mxu0 %v613
        %644 = vmatprep.subr.mxu0 0.0
        %645 = vmatpush1.msra.mxu0 %v614
        %646 = vmatprep.subr.mxu0 0.0
        %647 = vmatpush1.msra.mxu0 %v615
        %648 = vmatprep.subr.mxu0 0.0
        %649 = vmatpush1.msra.mxu0 0.0
        %650 = vmatprep.subr.mxu0 0.0
        %651 = vmatpush1.msra.mxu0 0.0
        %652 = vmatprep.subr.mxu0 0.0
        %653 = vmatpush1.msra.mxu0 0.0
        %654 = vmatprep.subr.mxu0 0.0
        %655 = vmatpush1.msra.mxu0 0.0
        %656 = vmatprep.subr.mxu0 0.0
        %657 = vmatpush1.msra.mxu0 0.0
        %658 = vmatprep.subr.mxu0 0.0
        %659 = vmatpush1.msra.mxu0 0.0
        %660 = vmatprep.subr.mxu0 0.0
        %661 = vmatpush1.msra.mxu0 0.0
        %662 = vmatprep.subr.mxu0 0.0
        %663 = vmatpush1.msra.mxu0 0.0
        %664 = vmatprep.subr.mxu0 0.0
        %665 = vmatpush1.msra.mxu0 0.0
        %666 = vmatprep.subr.mxu0 0.0
        %667 = vmatpush1.msra.mxu0 0.0
        %668 = vmatprep.subr.mxu0 0.0
        %669 = vmatpush1.msra.mxu0 0.0
        %670 = vmatprep.subr.mxu0 0.0
        %671 = vmatpush1.msra.mxu0 0.0
        %672 = vmatprep.subr.mxu0 0.0
        %673 = vmatpush1.msra.mxu0 0.0
        %674 = vmatprep.subr.mxu0 0.0
        %675 = vmatpush1.msra.mxu0 0.0
        %676 = vmatprep.subr.mxu0 0.0
        %677 = vmatpush1.msra.mxu0 0.0
        %678 = vmatprep.subr.mxu0 0.0
        %679 = vmatpush1.msra.mxu0 0.0
        %680 = vmatprep.mubr.f32.mxu0 0.0
        %681 = vmatmul.mubr.f32.gmra.mrb[0].mxu0 %v599
        %v682 = vpop.f32.mrb[0].mxu0
        %v683 = vadd.f32 0.0, %v682
        %v684 = vpop.f32.mrb[0].mxu0
        %685 = vdwg.mxu0
        %v686 = vmul.f32 %v683, 0.0009765625
        %v687 = vld [vmem:[%s7] sm:$0xff]
        %vm688 = vcmask 64512
        %v690 = vsel %vm688, %v686, 0
        %692 = vmatprep.subr.mxu0 0.0
        %693 = vmatpush1.msra.mxu0 %v687
        %694 = vmatprep.subr.mxu0 0.0
        %695 = vmatpush1.msra.mxu0 0.0
        %696 = vmatprep.subr.mxu0 0.0
        %697 = vmatpush1.msra.mxu0 0.0
        %698 = vmatprep.subr.mxu0 0.0
        %699 = vmatpush1.msra.mxu0 0.0
        %700 = vmatprep.subr.mxu0 0.0
        %701 = vmatpush1.msra.mxu0 0.0
        %702 = vmatprep.subr.mxu0 0.0
        %703 = vmatpush1.msra.mxu0 0.0
        %704 = vmatprep.subr.mxu0 0.0
        %705 = vmatpush1.msra.mxu0 0.0
        %706 = vmatprep.subr.mxu0 0.0
        %707 = vmatpush1.msra.mxu0 0.0
        %708 = vmatprep.subr.mxu0 0.0
        %709 = vmatpush1.msra.mxu0 0.0
        %710 = vmatprep.subr.mxu0 0.0
        %711 = vmatpush1.msra.mxu0 0.0
        %712 = vmatprep.subr.mxu0 0.0
        %713 = vmatpush1.msra.mxu0 0.0
        %714 = vmatprep.subr.mxu0 0.0
        %715 = vmatpush1.msra.mxu0 0.0
        %716 = vmatprep.subr.mxu0 0.0
        %717 = vmatpush1.msra.mxu0 0.0
        %718 = vmatprep.subr.mxu0 0.0
        %719 = vmatpush1.msra.mxu0 0.0
        %720 = vmatprep.subr.mxu0 0.0
        %721 = vmatpush1.msra.mxu0 0.0
        %722 = vmatprep.subr.mxu0 0.0
        %723 = vmatpush1.msra.mxu0 0.0
        %724 = vmatprep.subr.mxu0 0.0
        %725 = vmatpush1.msra.mxu0 0.0
        %726 = vmatprep.subr.mxu0 0.0
        %727 = vmatpush1.msra.mxu0 0.0
        %728 = vmatprep.subr.mxu0 0.0
        %729 = vmatpush1.msra.mxu0 0.0
        %730 = vmatprep.subr.mxu0 0.0
        %731 = vmatpush1.msra.mxu0 0.0
        %732 = vmatprep.subr.mxu0 0.0
        %733 = vmatpush1.msra.mxu0 0.0
        %734 = vmatprep.subr.mxu0 0.0
        %735 = vmatpush1.msra.mxu0 0.0
        %736 = vmatprep.subr.mxu0 0.0
        %737 = vmatpush1.msra.mxu0 0.0
        %738 = vmatprep.subr.mxu0 0.0
        %739 = vmatpush1.msra.mxu0 0.0
        %740 = vmatprep.subr.mxu0 0.0
        %741 = vmatpush1.msra.mxu0 0.0
        %742 = vmatprep.subr.mxu0 0.0
        %743 = vmatpush1.msra.mxu0 0.0
        %744 = vmatprep.subr.mxu0 0.0
        %745 = vmatpush1.msra.mxu0 0.0
        %746 = vmatprep.subr.mxu0 0.0
        %747 = vmatpush1.msra.mxu0 0.0
        %748 = vmatprep.subr.mxu0 0.0
        %749 = vmatpush1.msra.mxu0 0.0
        %750 = vmatprep.subr.mxu0 0.0
        %751 = vmatpush1.msra.mxu0 0.0
        %752 = vmatprep.subr.mxu0 0.0
        %753 = vmatpush1.msra.mxu0 0.0
        %754 = vmatprep.subr.mxu0 0.0
        %755 = vmatpush1.msra.mxu0 0.0
        %756 = vmatprep.mubr.f32.mxu0 0.0
        %757 = vmatmul.mubr.f32.gmra.mrb[0].mxu0 %v690
        %v758 = vpop.f32.mrb[0].mxu0
        %v759 = vadd.f32 0.0, %v758
        %v760 = vpop.f32.mrb[0].mxu0
        %761 = vdwg.mxu0
        %v762 = vlaneseq
        %v763 = vshrl.u32 %v762, 7
        %v764 = vsub.s32 0, %v763
        %v765 = vrot.slane %v759, %v764
        %v766 = vsub.f32 %v579, %v765
        %v767 = vsub.f32 %v580, %v765
        %v768 = vsub.f32 %v581, %v765
        %v769 = vsub.f32 %v582, %v765
        %v770 = vsub.f32 %v583, %v765
        %v771 = vsub.f32 %v584, %v765
        %v772 = vsub.f32 %v585, %v765
        %v773 = vsub.f32 %v586, %v765
        %v774 = vmul.f32 %v766, %v766
        %v775 = vmul.f32 %v767, %v767
        %v776 = vmul.f32 %v768, %v768
        %v777 = vmul.f32 %v769, %v769
        %v778 = vmul.f32 %v770, %v770
        %v779 = vmul.f32 %v771, %v771
        %v780 = vmul.f32 %v772, %v772
        %v781 = vmul.f32 %v773, %v773
        %v782 = vadd.f32 %v774, %v775
        %v783 = vadd.f32 %v782, %v776
        %v784 = vadd.f32 %v783, %v777
        %v785 = vadd.f32 %v784, %v778
        %v786 = vadd.f32 %v785, %v779
        %v787 = vadd.f32 %v786, %v780
        %v788 = vadd.f32 %v787, %v781
        %v789 = vrot.slane %v788, 4
        %v790 = vadd.f32 %v788, %v789
        %v791 = vrot.slane %v790, 2
        %v792 = vadd.f32 %v790, %v791
        %v793 = vrot.slane %v792, 1
        %v794 = vadd.f32 %v792, %v793
        %795 = vmatprep.subr.mxu0 0.0
        %796 = vmatpush1.msra.mxu0 %v600
        %797 = vmatprep.subr.mxu0 0.0
        %798 = vmatpush1.msra.mxu0 %v601
        %799 = vmatprep.subr.mxu0 0.0
        %800 = vmatpush1.msra.mxu0 %v602
        %801 = vmatprep.subr.mxu0 0.0
        %802 = vmatpush1.msra.mxu0 %v603
        %803 = vmatprep.subr.mxu0 0.0
        %804 = vmatpush1.msra.mxu0 %v604
        %805 = vmatprep.subr.mxu0 0.0
        %806 = vmatpush1.msra.mxu0 %v605
        %807 = vmatprep.subr.mxu0 0.0
        %808 = vmatpush1.msra.mxu0 %v606
        %809 = vmatprep.subr.mxu0 0.0
        %810 = vmatpush1.msra.mxu0 %v607
        %811 = vmatprep.subr.mxu0 0.0
        %812 = vmatpush1.msra.mxu0 %v608
        %813 = vmatprep.subr.mxu0 0.0
        %814 = vmatpush1.msra.mxu0 %v609
        %815 = vmatprep.subr.mxu0 0.0
        %816 = vmatpush1.msra.mxu0 %v610
        %817 = vmatprep.subr.mxu0 0.0
        %818 = vmatpush1.msra.mxu0 %v611
        %819 = vmatprep.subr.mxu0 0.0
        %820 = vmatpush1.msra.mxu0 %v612
        %821 = vmatprep.subr.mxu0 0.0
        %822 = vmatpush1.msra.mxu0 %v613
        %823 = vmatprep.subr.mxu0 0.0
        %824 = vmatpush1.msra.mxu0 %v614
        %825 = vmatprep.subr.mxu0 0.0
        %826 = vmatpush1.msra.mxu0 %v615
        %827 = vmatprep.subr.mxu0 0.0
        %828 = vmatpush1.msra.mxu0 0.0
        %829 = vmatprep.subr.mxu0 0.0
        %830 = vmatpush1.msra.mxu0 0.0
        %831 = vmatprep.subr.mxu0 0.0
        %832 = vmatpush1.msra.mxu0 0.0
        %833 = vmatprep.subr.mxu0 0.0
        %834 = vmatpush1.msra.mxu0 0.0
        %835 = vmatprep.subr.mxu0 0.0
        %836 = vmatpush1.msra.mxu0 0.0
        %837 = vmatprep.subr.mxu0 0.0
        %838 = vmatpush1.msra.mxu0 0.0
        %839 = vmatprep.subr.mxu0 0.0
        %840 = vmatpush1.msra.mxu0 0.0
        %841 = vmatprep.subr.mxu0 0.0
        %842 = vmatpush1.msra.mxu0 0.0
        %843 = vmatprep.subr.mxu0 0.0
        %844 = vmatpush1.msra.mxu0 0.0
        %845 = vmatprep.subr.mxu0 0.0
        %846 = vmatpush1.msra.mxu0 0.0
        %847 = vmatprep.subr.mxu0 0.0
        %848 = vmatpush1.msra.mxu0 0.0
        %849 = vmatprep.subr.mxu0 0.0
        %850 = vmatpush1.msra.mxu0 0.0
        %851 = vmatprep.subr.mxu0 0.0
        %852 = vmatpush1.msra.mxu0 0.0
        %853 = vmatprep.subr.mxu0 0.0
        %854 = vmatpush1.msra.mxu0 0.0
        %855 = vmatprep.subr.mxu0 0.0
        %856 = vmatpush1.msra.mxu0 0.0
        %857 = vmatprep.subr.mxu0 0.0
        %858 = vmatpush1.msra.mxu0 0.0
        %859 = vmatprep.mubr.f32.mxu0 0.0
        %860 = vmatmul.mubr.f32.gmra.mrb[0].mxu0 %v794
        %v861 = vpop.f32.mrb[0].mxu0
        %v862 = vadd.f32 0.0, %v861
        %v863 = vpop.f32.mrb[0].mxu0
        %864 = vdwg.mxu0
        %v865 = vmul.f32 %v862, 0.0009765625
        %v866 = vadd.f32 %v865, 1e-05
        %v867 = vrsqrt.pop %v866
        %v869 = vsel %vm688, %v867, 0
        %871 = vmatprep.subr.mxu0 0.0
        %872 = vmatpush1.msra.mxu0 %v687
        %873 = vmatprep.subr.mxu0 0.0
        %874 = vmatpush1.msra.mxu0 0.0
        %875 = vmatprep.subr.mxu0 0.0
        %876 = vmatpush1.msra.mxu0 0.0
        %877 = vmatprep.subr.mxu0 0.0
        %878 = vmatpush1.msra.mxu0 0.0
        %879 = vmatprep.subr.mxu0 0.0
        %880 = vmatpush1.msra.mxu0 0.0
        %881 = vmatprep.subr.mxu0 0.0
        %882 = vmatpush1.msra.mxu0 0.0
        %883 = vmatprep.subr.mxu0 0.0
        %884 = vmatpush1.msra.mxu0 0.0
        %885 = vmatprep.subr.mxu0 0.0
        %886 = vmatpush1.msra.mxu0 0.0
        %887 = vmatprep.subr.mxu0 0.0
        %888 = vmatpush1.msra.mxu0 0.0
        %889 = vmatprep.subr.mxu0 0.0
        %890 = vmatpush1.msra.mxu0 0.0
        %891 = vmatprep.subr.mxu0 0.0
        %892 = vmatpush1.msra.mxu0 0.0
        %893 = vmatprep.subr.mxu0 0.0
        %894 = vmatpush1.msra.mxu0 0.0
        %895 = vmatprep.subr.mxu0 0.0
        %896 = vmatpush1.msra.mxu0 0.0
        %897 = vmatprep.subr.mxu0 0.0
        %898 = vmatpush1.msra.mxu0 0.0
        %899 = vmatprep.subr.mxu0 0.0
        %900 = vmatpush1.msra.mxu0 0.0
        %901 = vmatprep.subr.mxu0 0.0
        %902 = vmatpush1.msra.mxu0 0.0
        %903 = vmatprep.subr.mxu0 0.0
        %904 = vmatpush1.msra.mxu0 0.0
        %905 = vmatprep.subr.mxu0 0.0
        %906 = vmatpush1.msra.mxu0 0.0
        %907 = vmatprep.subr.mxu0 0.0
        %908 = vmatpush1.msra.mxu0 0.0
        %909 = vmatprep.subr.mxu0 0.0
        %910 = vmatpush1.msra.mxu0 0.0
        %911 = vmatprep.subr.mxu0 0.0
        %912 = vmatpush1.msra.mxu0 0.0
        %913 = vmatprep.subr.mxu0 0.0
        %914 = vmatpush1.msra.mxu0 0.0
        %915 = vmatprep.subr.mxu0 0.0
        %916 = vmatpush1.msra.mxu0 0.0
        %917 = vmatprep.subr.mxu0 0.0
        %918 = vmatpush1.msra.mxu0 0.0
        %919 = vmatprep.subr.mxu0 0.0
        %920 = vmatpush1.msra.mxu0 0.0
        %921 = vmatprep.subr.mxu0 0.0
        %922 = vmatpush1.msra.mxu0 0.0
        %923 = vmatprep.subr.mxu0 0.0
        %924 = vmatpush1.msra.mxu0 0.0
        %925 = vmatprep.subr.mxu0 0.0
        %926 = vmatpush1.msra.mxu0 0.0
        %927 = vmatprep.subr.mxu0 0.0
        %928 = vmatpush1.msra.mxu0 0.0
        %929 = vmatprep.subr.mxu0 0.0
        %930 = vmatpush1.msra.mxu0 0.0
        %931 = vmatprep.subr.mxu0 0.0
        %932 = vmatpush1.msra.mxu0 0.0
        %933 = vmatprep.subr.mxu0 0.0
        %934 = vmatpush1.msra.mxu0 0.0
        %935 = vmatprep.mubr.f32.mxu0 0.0
        %936 = vmatmul.mubr.f32.gmra.mrb[0].mxu0 %v869
        %v937 = vpop.f32.mrb[0].mxu0
        %v938 = vadd.f32 0.0, %v937
        %v939 = vpop.f32.mrb[0].mxu0
        %940 = vdwg.mxu0
        %v941 = vld [vmem:[%s4] sm:$0x1]
        %v942 = vmul.f32 %v938, %v941
        %v943 = vlaneseq
        %v944 = vshrl.u32 %v943, 7
        %v945 = vsub.s32 0, %v944
        %v946 = vrot.slane %v942, %v945
        %v947 = vmul.f32 %v766, %v946
        %v948 = vmul.f32 %v767, %v946
        %v949 = vmul.f32 %v768, %v946
        %v950 = vmul.f32 %v769, %v946
        %v951 = vmul.f32 %v770, %v946
        %v952 = vmul.f32 %v771, %v946
        %v953 = vmul.f32 %v772, %v946
        %v954 = vmul.f32 %v773, %v946
        %v955 = vld [vmem:[%s5] sm:$0x1]
        %v957 = vlaneseq
        %v958 = vshrl.u32 %v957, 7
        %v959 = vsub.s32 0, %v958
        %v960 = vrot.slane %v955, %v959
        %v962 = vadd.f32 %v947, %v960
        %v963 = vadd.f32 %v948, %v960
        %v964 = vadd.f32 %v949, %v960
        %v965 = vadd.f32 %v950, %v960
        %v966 = vadd.f32 %v951, %v960
        %v967 = vadd.f32 %v952, %v960
        %v968 = vadd.f32 %v953, %v960
        %v969 = vadd.f32 %v954, %v960
        %v970 = vsub.f32 0.0, %v962
        %v971 = vsub.f32 0.0, %v963
        %v972 = vsub.f32 0.0, %v964
        %v973 = vsub.f32 0.0, %v965
        %v974 = vsub.f32 0.0, %v966
        %v975 = vsub.f32 0.0, %v967
        %v976 = vsub.f32 0.0, %v968
        %v977 = vsub.f32 0.0, %v969
        %v978 = vmul.f32 %v970, 1.442695
        %v979 = vpow.pop %v978
        %v980 = vmul.f32 %v971, 1.442695
        %v981 = vpow.pop %v980
        %v982 = vmul.f32 %v972, 1.442695
        %v983 = vpow.pop %v982
        %v984 = vmul.f32 %v973, 1.442695
        %v985 = vpow.pop %v984
        %v986 = vmul.f32 %v974, 1.442695
        %v987 = vpow.pop %v986
        %v988 = vmul.f32 %v975, 1.442695
        %v989 = vpow.pop %v988
        %v990 = vmul.f32 %v976, 1.442695
        %v991 = vpow.pop %v990
        %v992 = vmul.f32 %v977, 1.442695
        %v993 = vpow.pop %v992
        %v994 = vadd.f32 %v979, 1.0
        %v995 = vadd.f32 %v981, 1.0
        %v996 = vadd.f32 %v983, 1.0
        %v997 = vadd.f32 %v985, 1.0
        %v998 = vadd.f32 %v987, 1.0
        %v999 = vadd.f32 %v989, 1.0
        %v1000 = vadd.f32 %v991, 1.0
        %v1001 = vadd.f32 %v993, 1.0
        %v1002 = vrcp.pop %v994
        %v1003 = vmul.f32 1.0, %v1002
        %v1004 = vrcp.pop %v995
        %v1005 = vmul.f32 1.0, %v1004
        %v1006 = vrcp.pop %v996
        %v1007 = vmul.f32 1.0, %v1006
        %v1008 = vrcp.pop %v997
        %v1009 = vmul.f32 1.0, %v1008
        %v1010 = vrcp.pop %v998
        %v1011 = vmul.f32 1.0, %v1010
        %v1012 = vrcp.pop %v999
        %v1013 = vmul.f32 1.0, %v1012
        %v1014 = vrcp.pop %v1000
        %v1015 = vmul.f32 1.0, %v1014
        %v1016 = vrcp.pop %v1001
        %v1017 = vmul.f32 1.0, %v1016
        %v1018 = vmul.f32 %v962, %v1003
        %v1019 = vmul.f32 %v963, %v1005
        %v1020 = vmul.f32 %v964, %v1007
        %v1021 = vmul.f32 %v965, %v1009
        %v1022 = vmul.f32 %v966, %v1011
        %v1023 = vmul.f32 %v967, %v1013
        %v1024 = vmul.f32 %v968, %v1015
        %v1025 = vmul.f32 %v969, %v1017
        %1026 = vst [vmem:[#allocation2] sm:$0xff] 0.0
        %1027 = vst [vmem:[#allocation2 + $0x8] sm:$0x3] 0.0
        %1028 = vst [vmem:[#allocation2 + $0x10] sm:$0xff] 0.0
        %1029 = vst [vmem:[#allocation2 + $0x18] sm:$0x3] 0.0
        %1030 = vst [vmem:[#allocation2 + $0x20] sm:$0xff] 0.0
        %1031 = vst [vmem:[#allocation2 + $0x28] sm:$0x3] 0.0
        %1032 = vst [vmem:[#allocation2 + $0x30] sm:$0xff] 0.0
        %1033 = vst [vmem:[#allocation2 + $0x38] sm:$0x3] 0.0
        %1034 = vst [vmem:[#allocation2 + $0x40] sm:$0xff] 0.0
        %1035 = vst [vmem:[#allocation2 + $0x48] sm:$0x3] 0.0
        %1036 = vst [vmem:[#allocation2 + $0x50] sm:$0xff] 0.0
        %1037 = vst [vmem:[#allocation2 + $0x58] sm:$0x3] 0.0
        %1038 = vst [vmem:[#allocation2 + $0x60] sm:$0xff] 0.0
        %1039 = vst [vmem:[#allocation2 + $0x68] sm:$0x3] 0.0
        %1040 = vst [vmem:[#allocation2 + $0x70] sm:$0xff] 0.0
        %1041 = vst [vmem:[#allocation2 + $0x78] sm:$0x3] 0.0
        %1042 = vst [vmem:[#allocation2 + $0x80] sm:$0xff] 0.0
        %1043 = vst [vmem:[#allocation2 + $0x88] sm:$0x3] 0.0
        %1044 = vst [vmem:[#allocation2 + $0x90] sm:$0xff] 0.0
        %1045 = vst [vmem:[#allocation2 + $0x98] sm:$0x3] 0.0
        %s1046 = scalar_lea.vmem [#allocation2], 16
        %1047 = vst [vmem:[%s1046 + $0x1] sm:$0xff] %v1018
        %1048 = vst [vmem:[%s1046 + $0x11] sm:$0xff] %v1019
        %1049 = vst [vmem:[%s1046 + $0x21] sm:$0xff] %v1020
        %1050 = vst [vmem:[%s1046 + $0x31] sm:$0xff] %v1021
        %1051 = vst [vmem:[%s1046 + $0x41] sm:$0xff] %v1022
        %1052 = vst [vmem:[%s1046 + $0x51] sm:$0xff] %v1023
        %1053 = vst [vmem:[%s1046 + $0x61] sm:$0xff] %v1024
        %1054 = vst [vmem:[%s1046 + $0x71] sm:$0xff] %v1025
        %v1055 = vld [vmem:[#allocation2] sm:$0xff]
        %v1056 = vld [vmem:[#allocation2 + $0x10] sm:$0xff]
        %v1057 = vld [vmem:[#allocation2 + $0x20] sm:$0xff]
        %v1058 = vld [vmem:[#allocation2 + $0x30] sm:$0xff]
        %v1059 = vld [vmem:[#allocation2 + $0x40] sm:$0xff]
        %v1060 = vld [vmem:[#allocation2 + $0x50] sm:$0xff]
        %v1061 = vld [vmem:[#allocation2 + $0x60] sm:$0xff]
        %v1062 = vld [vmem:[#allocation2 + $0x70] sm:$0xff]
        %v1063 = vld [vmem:[#allocation8] sm:$0xff]
        %v1064 = vld [vmem:[#allocation8 + $0x8] sm:$0xff]
        %v1065 = vld [vmem:[#allocation8 + $0x10] sm:$0xff]
        %v1066 = vld [vmem:[#allocation8 + $0x18] sm:$0xff]
        %v1067 = vld [vmem:[#allocation8 + $0x20] sm:$0xff]
        %v1068 = vld [vmem:[#allocation8 + $0x28] sm:$0xff]
        %v1069 = vld [vmem:[#allocation8 + $0x30] sm:$0xff]
        %v1070 = vld [vmem:[#allocation8 + $0x38] sm:$0xff]
        %v1071 = vld [vmem:[#allocation8 + $0x40] sm:$0xff]
        %v1072 = vld [vmem:[#allocation8 + $0x48] sm:$0xff]
        %v1073 = vld [vmem:[#allocation8 + $0x50] sm:$0xff]
        %v1074 = vld [vmem:[#allocation8 + $0x58] sm:$0xff]
        %v1075 = vld [vmem:[#allocation8 + $0x60] sm:$0xff]
        %v1076 = vld [vmem:[#allocation8 + $0x68] sm:$0xff]
        %v1077 = vld [vmem:[#allocation8 + $0x70] sm:$0xff]
        %v1078 = vld [vmem:[#allocation8 + $0x78] sm:$0xff]
        %v1079 = vld [vmem:[#allocation2 + $0x1] sm:$0xff]
        %v1080 = vld [vmem:[#allocation2 + $0x11] sm:$0xff]
        %v1081 = vld [vmem:[#allocation2 + $0x21] sm:$0xff]
        %v1082 = vld [vmem:[#allocation2 + $0x31] sm:$0xff]
        %v1083 = vld [vmem:[#allocation2 + $0x41] sm:$0xff]
        %v1084 = vld [vmem:[#allocation2 + $0x51] sm:$0xff]
        %v1085 = vld [vmem:[#allocation2 + $0x61] sm:$0xff]
        %v1086 = vld [vmem:[#allocation2 + $0x71] sm:$0xff]
        %s1087 = scalar_lea.vmem [#allocation8], 128
        %v1088 = vld [vmem:[%s1087] sm:$0xff]
        %v1089 = vld [vmem:[%s1087 + $0x8] sm:$0xff]
        %v1090 = vld [vmem:[%s1087 + $0x10] sm:$0xff]
        %v1091 = vld [vmem:[%s1087 + $0x18] sm:$0xff]
        %v1092 = vld [vmem:[%s1087 + $0x20] sm:$0xff]
        %v1093 = vld [vmem:[%s1087 + $0x28] sm:$0xff]
        %v1094 = vld [vmem:[%s1087 + $0x30] sm:$0xff]
        %v1095 = vld [vmem:[%s1087 + $0x38] sm:$0xff]
        %v1096 = vld [vmem:[%s1087 + $0x40] sm:$0xff]
        %v1097 = vld [vmem:[%s1087 + $0x48] sm:$0xff]
        %v1098 = vld [vmem:[%s1087 + $0x50] sm:$0xff]
        %v1099 = vld [vmem:[%s1087 + $0x58] sm:$0xff]
        %v1100 = vld [vmem:[%s1087 + $0x60] sm:$0xff]
        %v1101 = vld [vmem:[%s1087 + $0x68] sm:$0xff]
        %v1102 = vld [vmem:[%s1087 + $0x70] sm:$0xff]
        %v1103 = vld [vmem:[%s1087 + $0x78] sm:$0xff]
        %1104 = vmatprep.subr.mxu0 0.0
        %1105 = vmatpush1.msra.mxu0 %v1088
        %1106 = vmatprep.subr.mxu0 0.0
        %1107 = vmatpush1.msra.mxu0 %v1089
        %1108 = vmatprep.subr.mxu0 0.0
        %1109 = vmatpush1.msra.mxu0 %v1090
        %1110 = vmatprep.subr.mxu0 0.0
        %1111 = vmatpush1.msra.mxu0 %v1091
        %1112 = vmatprep.subr.mxu0 0.0
        %1113 = vmatpush1.msra.mxu0 %v1092
        %1114 = vmatprep.subr.mxu0 0.0
        %1115 = vmatpush1.msra.mxu0 %v1093
        %1116 = vmatprep.subr.mxu0 0.0
        %1117 = vmatpush1.msra.mxu0 %v1094
        %1118 = vmatprep.subr.mxu0 0.0
        %1119 = vmatpush1.msra.mxu0 %v1095
        %1120 = vmatprep.subr.mxu0 0.0
        %1121 = vmatpush1.msra.mxu0 %v1096
        %1122 = vmatprep.subr.mxu0 0.0
        %1123 = vmatpush1.msra.mxu0 %v1097
        %1124 = vmatprep.subr.mxu0 0.0
        %1125 = vmatpush1.msra.mxu0 %v1098
        %1126 = vmatprep.subr.mxu0 0.0
        %1127 = vmatpush1.msra.mxu0 %v1099
        %1128 = vmatprep.subr.mxu0 0.0
        %1129 = vmatpush1.msra.mxu0 %v1100
        %1130 = vmatprep.subr.mxu0 0.0
        %1131 = vmatpush1.msra.mxu0 %v1101
        %1132 = vmatprep.subr.mxu0 0.0
        %1133 = vmatpush1.msra.mxu0 %v1102
        %1134 = vmatprep.subr.mxu0 0.0
        %1135 = vmatpush1.msra.mxu0 %v1103
        %1136 = vmatprep.subr.mxu0 0.0
        %1137 = vmatpush1.msra.mxu0 0.0
        %1138 = vmatprep.subr.mxu0 0.0
        %1139 = vmatpush1.msra.mxu0 0.0
        %1140 = vmatprep.subr.mxu0 0.0
        %1141 = vmatpush1.msra.mxu0 0.0
        %1142 = vmatprep.subr.mxu0 0.0
        %1143 = vmatpush1.msra.mxu0 0.0
        %1144 = vmatprep.subr.mxu0 0.0
        %1145 = vmatpush1.msra.mxu0 0.0
        %1146 = vmatprep.subr.mxu0 0.0
        %1147 = vmatpush1.msra.mxu0 0.0
        %1148 = vmatprep.subr.mxu0 0.0
        %1149 = vmatpush1.msra.mxu0 0.0
        %1150 = vmatprep.subr.mxu0 0.0
        %1151 = vmatpush1.msra.mxu0 0.0
        %1152 = vmatprep.subr.mxu0 0.0
        %1153 = vmatpush1.msra.mxu0 0.0
        %1154 = vmatprep.subr.mxu0 0.0
        %1155 = vmatpush1.msra.mxu0 0.0
        %1156 = vmatprep.subr.mxu0 0.0
        %1157 = vmatpush1.msra.mxu0 0.0
        %1158 = vmatprep.subr.mxu0 0.0
        %1159 = vmatpush1.msra.mxu0 0.0
        %1160 = vmatprep.subr.mxu0 0.0
        %1161 = vmatpush1.msra.mxu0 0.0
        %1162 = vmatprep.subr.mxu0 0.0
        %1163 = vmatpush1.msra.mxu0 0.0
        %1164 = vmatprep.subr.mxu0 0.0
        %1165 = vmatpush1.msra.mxu0 0.0
        %1166 = vmatprep.subr.mxu0 0.0
        %1167 = vmatpush1.msra.mxu0 0.0
        %1168 = vmatprep.mubr.f32.mxu0 0.0
        %1169 = vmatmul.mubr.f32.gmra.mrb[0].mxu0 %v1079
        %v1170 = vpop.f32.mrb[0].mxu0
        %v1171 = vadd.f32 0.0, %v1170
        %v1172 = vpop.f32.mrb[0].mxu0
        %1173 = vmatprep.mubr.f32.mxu0 0.0
        %1174 = vmatmul.mubr.f32.gmra.mrb[0].mxu0 %v1080
        %v1175 = vpop.f32.mrb[0].mxu0
        %v1176 = vadd.f32 0.0, %v1175
        %v1177 = vpop.f32.mrb[0].mxu0
        %1178 = vmatprep.mubr.f32.mxu0 0.0
        %1179 = vmatmul.mubr.f32.gmra.mrb[0].mxu0 %v1081
        %v1180 = vpop.f32.mrb[0].mxu0
        %v1181 = vadd.f32 0.0, %v1180
        %v1182 = vpop.f32.mrb[0].mxu0
        %1183 = vmatprep.mubr.f32.mxu0 0.0
        %1184 = vmatmul.mubr.f32.gmra.mrb[0].mxu0 %v1082
        %v1185 = vpop.f32.mrb[0].mxu0
        %v1186 = vadd.f32 0.0, %v1185
        %v1187 = vpop.f32.mrb[0].mxu0
        %1188 = vmatprep.mubr.f32.mxu0 0.0
        %1189 = vmatmul.mubr.f32.gmra.mrb[0].mxu0 %v1083
        %v1190 = vpop.f32.mrb[0].mxu0
        %v1191 = vadd.f32 0.0, %v1190
        %v1192 = vpop.f32.mrb[0].mxu0
        %1193 = vmatprep.mubr.f32.mxu0 0.0
        %1194 = vmatmul.mubr.f32.gmra.mrb[0].mxu0 %v1084
        %v1195 = vpop.f32.mrb[0].mxu0
        %v1196 = vadd.f32 0.0, %v1195
        %v1197 = vpop.f32.mrb[0].mxu0
        %1198 = vmatprep.mubr.f32.mxu0 0.0
        %1199 = vmatmul.mubr.f32.gmra.mrb[0].mxu0 %v1085
        %v1200 = vpop.f32.mrb[0].mxu0
        %v1201 = vadd.f32 0.0, %v1200
        %v1202 = vpop.f32.mrb[0].mxu0
        %1203 = vmatprep.mubr.f32.mxu0 0.0
        %1204 = vmatmul.mubr.f32.gmra.mrb[0].mxu0 %v1086
        %v1205 = vpop.f32.mrb[0].mxu0
        %v1206 = vadd.f32 0.0, %v1205
        %v1207 = vpop.f32.mrb[0].mxu0
        %1208 = vdwg.mxu0
        %1209 = vmatprep.subr.mxu0 0.0
        %1210 = vmatpush1.msra.mxu0 %v1063
        %1211 = vmatprep.subr.mxu0 0.0
        %1212 = vmatpush1.msra.mxu0 %v1064
        %1213 = vmatprep.subr.mxu0 0.0
        %1214 = vmatpush1.msra.mxu0 %v1065
        %1215 = vmatprep.subr.mxu0 0.0
        %1216 = vmatpush1.msra.mxu0 %v1066
        %1217 = vmatprep.subr.mxu0 0.0
        %1218 = vmatpush1.msra.mxu0 %v1067
        %1219 = vmatprep.subr.mxu0 0.0
        %1220 = vmatpush1.msra.mxu0 %v1068
        %1221 = vmatprep.subr.mxu0 0.0
        %1222 = vmatpush1.msra.mxu0 %v1069
        %1223 = vmatprep.subr.mxu0 0.0
        %1224 = vmatpush1.msra.mxu0 %v1070
        %1225 = vmatprep.subr.mxu0 0.0
        %1226 = vmatpush1.msra.mxu0 %v1071
        %1227 = vmatprep.subr.mxu0 0.0
        %1228 = vmatpush1.msra.mxu0 %v1072
        %1229 = vmatprep.subr.mxu0 0.0
        %1230 = vmatpush1.msra.mxu0 %v1073
        %1231 = vmatprep.subr.mxu0 0.0
        %1232 = vmatpush1.msra.mxu0 %v1074
        %1233 = vmatprep.subr.mxu0 0.0
        %1234 = vmatpush1.msra.mxu0 %v1075
        %1235 = vmatprep.subr.mxu0 0.0
        %1236 = vmatpush1.msra.mxu0 %v1076
        %1237 = vmatprep.subr.mxu0 0.0
        %1238 = vmatpush1.msra.mxu0 %v1077
        %1239 = vmatprep.subr.mxu0 0.0
        %1240 = vmatpush1.msra.mxu0 %v1078
        %1241 = vmatprep.subr.mxu0 0.0
        %1242 = vmatpush1.msra.mxu0 0.0
        %1243 = vmatprep.subr.mxu0 0.0
        %1244 = vmatpush1.msra.mxu0 0.0
        %1245 = vmatprep.subr.mxu0 0.0
        %1246 = vmatpush1.msra.mxu0 0.0
        %1247 = vmatprep.subr.mxu0 0.0
        %1248 = vmatpush1.msra.mxu0 0.0
        %1249 = vmatprep.subr.mxu0 0.0
        %1250 = vmatpush1.msra.mxu0 0.0
        %1251 = vmatprep.subr.mxu0 0.0
        %1252 = vmatpush1.msra.mxu0 0.0
        %1253 = vmatprep.subr.mxu0 0.0
        %1254 = vmatpush1.msra.mxu0 0.0
        %1255 = vmatprep.subr.mxu0 0.0
        %1256 = vmatpush1.msra.mxu0 0.0
        %1257 = vmatprep.subr.mxu0 0.0
        %1258 = vmatpush1.msra.mxu0 0.0
        %1259 = vmatprep.subr.mxu0 0.0
        %1260 = vmatpush1.msra.mxu0 0.0
        %1261 = vmatprep.subr.mxu0 0.0
        %1262 = vmatpush1.msra.mxu0 0.0
        %1263 = vmatprep.subr.mxu0 0.0
        %1264 = vmatpush1.msra.mxu0 0.0
        %1265 = vmatprep.subr.mxu0 0.0
        %1266 = vmatpush1.msra.mxu0 0.0
        %1267 = vmatprep.subr.mxu0 0.0
        %1268 = vmatpush1.msra.mxu0 0.0
        %1269 = vmatprep.subr.mxu0 0.0
        %1270 = vmatpush1.msra.mxu0 0.0
        %1271 = vmatprep.subr.mxu0 0.0
        %1272 = vmatpush1.msra.mxu0 0.0
        %1273 = vmatprep.mubr.f32.mxu0 0.0
        %1274 = vmatmul.mubr.f32.gmra.mrb[0].mxu0 %v1055
        %v1275 = vpop.f32.mrb[0].mxu0
        %v1276 = vadd.f32 %v1171, %v1275
        %v1277 = vpop.f32.mrb[0].mxu0
        %1278 = vmatprep.mubr.f32.mxu0 0.0
        %1279 = vmatmul.mubr.f32.gmra.mrb[0].mxu0 %v1056
        %v1280 = vpop.f32.mrb[0].mxu0
        %v1281 = vadd.f32 %v1176, %v1280
        %v1282 = vpop.f32.mrb[0].mxu0
        %1283 = vmatprep.mubr.f32.mxu0 0.0
        %1284 = vmatmul.mubr.f32.gmra.mrb[0].mxu0 %v1057
        %v1285 = vpop.f32.mrb[0].mxu0
        %v1286 = vadd.f32 %v1181, %v1285
        %v1287 = vpop.f32.mrb[0].mxu0
        %1288 = vmatprep.mubr.f32.mxu0 0.0
        %1289 = vmatmul.mubr.f32.gmra.mrb[0].mxu0 %v1058
        %v1290 = vpop.f32.mrb[0].mxu0
        %v1291 = vadd.f32 %v1186, %v1290
        %v1292 = vpop.f32.mrb[0].mxu0
        %1293 = vmatprep.mubr.f32.mxu0 0.0
        %1294 = vmatmul.mubr.f32.gmra.mrb[0].mxu0 %v1059
        %v1295 = vpop.f32.mrb[0].mxu0
        %v1296 = vadd.f32 %v1191, %v1295
        %v1297 = vpop.f32.mrb[0].mxu0
        %1298 = vmatprep.mubr.f32.mxu0 0.0
        %1299 = vmatmul.mubr.f32.gmra.mrb[0].mxu0 %v1060
        %v1300 = vpop.f32.mrb[0].mxu0
        %v1301 = vadd.f32 %v1196, %v1300
        %v1302 = vpop.f32.mrb[0].mxu0
        %1303 = vmatprep.mubr.f32.mxu0 0.0
        %1304 = vmatmul.mubr.f32.gmra.mrb[0].mxu0 %v1061
        %v1305 = vpop.f32.mrb[0].mxu0
        %v1306 = vadd.f32 %v1201, %v1305
        %v1307 = vpop.f32.mrb[0].mxu0
        %1308 = vmatprep.mubr.f32.mxu0 0.0
        %1309 = vmatmul.mubr.f32.gmra.mrb[0].mxu0 %v1062
        %v1310 = vpop.f32.mrb[0].mxu0
        %v1311 = vadd.f32 %v1206, %v1310
        %v1312 = vpop.f32.mrb[0].mxu0
        %1313 = vdwg.mxu0
        %v1314 = vld [vmem:[#allocation2 + $0x2] sm:$0xff]
        %v1315 = vld [vmem:[#allocation2 + $0x12] sm:$0xff]
        %v1316 = vld [vmem:[#allocation2 + $0x22] sm:$0xff]
        %v1317 = vld [vmem:[#allocation2 + $0x32] sm:$0xff]
        %v1318 = vld [vmem:[#allocation2 + $0x42] sm:$0xff]
        %v1319 = vld [vmem:[#allocation2 + $0x52] sm:$0xff]
        %v1320 = vld [vmem:[#allocation2 + $0x62] sm:$0xff]
        %v1321 = vld [vmem:[#allocation2 + $0x72] sm:$0xff]
        %s1322 = scalar_lea.vmem [#allocation8], 256
        %v1323 = vld [vmem:[%s1322] sm:$0xff]
        %v1324 = vld [vmem:[%s1322 + $0x8] sm:$0xff]
        %v1325 = vld [vmem:[%s1322 + $0x10] sm:$0xff]
        %v1326 = vld [vmem:[%s1322 + $0x18] sm:$0xff]
        %v1327 = vld [vmem:[%s1322 + $0x20] sm:$0xff]
        %v1328 = vld [vmem:[%s1322 + $0x28] sm:$0xff]
        %v1329 = vld [vmem:[%s1322 + $0x30] sm:$0xff]
        %v1330 = vld [vmem:[%s1322 + $0x38] sm:$0xff]
        %v1331 = vld [vmem:[%s1322 + $0x40] sm:$0xff]
        %v1332 = vld [vmem:[%s1322 + $0x48] sm:$0xff]
        %v1333 = vld [vmem:[%s1322 + $0x50] sm:$0xff]
        %v1334 = vld [vmem:[%s1322 + $0x58] sm:$0xff]
        %v1335 = vld [vmem:[%s1322 + $0x60] sm:$0xff]
        %v1336 = vld [vmem:[%s1322 + $0x68] sm:$0xff]
        %v1337 = vld [vmem:[%s1322 + $0x70] sm:$0xff]
        %v1338 = vld [vmem:[%s1322 + $0x78] sm:$0xff]
        %1339 = vmatprep.subr.mxu0 0.0
        %1340 = vmatpush1.msra.mxu0 %v1323
        %1341 = vmatprep.subr.mxu0 0.0
        %1342 = vmatpush1.msra.mxu0 %v1324
        %1343 = vmatprep.subr.mxu0 0.0
        %1344 = vmatpush1.msra.mxu0 %v1325
        %1345 = vmatprep.subr.mxu0 0.0
        %1346 = vmatpush1.msra.mxu0 %v1326
        %1347 = vmatprep.subr.mxu0 0.0
        %1348 = vmatpush1.msra.mxu0 %v1327
        %1349 = vmatprep.subr.mxu0 0.0
        %1350 = vmatpush1.msra.mxu0 %v1328
        %1351 = vmatprep.subr.mxu0 0.0
        %1352 = vmatpush1.msra.mxu0 %v1329
        %1353 = vmatprep.subr.mxu0 0.0
        %1354 = vmatpush1.msra.mxu0 %v1330
        %1355 = vmatprep.subr.mxu0 0.0
        %1356 = vmatpush1.msra.mxu0 %v1331
        %1357 = vmatprep.subr.mxu0 0.0
        %1358 = vmatpush1.msra.mxu0 %v1332
        %1359 = vmatprep.subr.mxu0 0.0
        %1360 = vmatpush1.msra.mxu0 %v1333
        %1361 = vmatprep.subr.mxu0 0.0
        %1362 = vmatpush1.msra.mxu0 %v1334
        %1363 = vmatprep.subr.mxu0 0.0
        %1364 = vmatpush1.msra.mxu0 %v1335
        %1365 = vmatprep.subr.mxu0 0.0
        %1366 = vmatpush1.msra.mxu0 %v1336
        %1367 = vmatprep.subr.mxu0 0.0
        %1368 = vmatpush1.msra.mxu0 %v1337
        %1369 = vmatprep.subr.mxu0 0.0
        %1370 = vmatpush1.msra.mxu0 %v1338
        %1371 = vmatprep.subr.mxu0 0.0
        %1372 = vmatpush1.msra.mxu0 0.0
        %1373 = vmatprep.subr.mxu0 0.0
        %1374 = vmatpush1.msra.mxu0 0.0
        %1375 = vmatprep.subr.mxu0 0.0
        %1376 = vmatpush1.msra.mxu0 0.0
        %1377 = vmatprep.subr.mxu0 0.0
        %1378 = vmatpush1.msra.mxu0 0.0
        %1379 = vmatprep.subr.mxu0 0.0
        %1380 = vmatpush1.msra.mxu0 0.0
        %1381 = vmatprep.subr.mxu0 0.0
        %1382 = vmatpush1.msra.mxu0 0.0
        %1383 = vmatprep.subr.mxu0 0.0
        %1384 = vmatpush1.msra.mxu0 0.0
        %1385 = vmatprep.subr.mxu0 0.0
        %1386 = vmatpush1.msra.mxu0 0.0
        %1387 = vmatprep.subr.mxu0 0.0
        %1388 = vmatpush1.msra.mxu0 0.0
        %1389 = vmatprep.subr.mxu0 0.0
        %1390 = vmatpush1.msra.mxu0 0.0
        %1391 = vmatprep.subr.mxu0 0.0
        %1392 = vmatpush1.msra.mxu0 0.0
        %1393 = vmatprep.subr.mxu0 0.0
        %1394 = vmatpush1.msra.mxu0 0.0
        %1395 = vmatprep.subr.mxu0 0.0
        %1396 = vmatpush1.msra.mxu0 0.0
        %1397 = vmatprep.subr.mxu0 0.0
        %1398 = vmatpush1.msra.mxu0 0.0
        %1399 = vmatprep.subr.mxu0 0.0
        %1400 = vmatpush1.msra.mxu0 0.0
        %1401 = vmatprep.subr.mxu0 0.0
        %1402 = vmatpush1.msra.mxu0 0.0
        %1403 = vmatprep.mubr.f32.mxu0 0.0
        %1404 = vmatmul.mubr.f32.gmra.mrb[0].mxu0 %v1314
        %v1405 = vpop.f32.mrb[0].mxu0
        %v1406 = vadd.f32 0.0, %v1405
        %v1407 = vpop.f32.mrb[0].mxu0
        %1408 = vmatprep.mubr.f32.mxu0 0.0
        %1409 = vmatmul.mubr.f32.gmra.mrb[0].mxu0 %v1315
        %v1410 = vpop.f32.mrb[0].mxu0
        %v1411 = vadd.f32 0.0, %v1410
        %v1412 = vpop.f32.mrb[0].mxu0
        %1413 = vmatprep.mubr.f32.mxu0 0.0
        %1414 = vmatmul.mubr.f32.gmra.mrb[0].mxu0 %v1316
        %v1415 = vpop.f32.mrb[0].mxu0
        %v1416 = vadd.f32 0.0, %v1415
        %v1417 = vpop.f32.mrb[0].mxu0
        %1418 = vmatprep.mubr.f32.mxu0 0.0
        %1419 = vmatmul.mubr.f32.gmra.mrb[0].mxu0 %v1317
        %v1420 = vpop.f32.mrb[0].mxu0
        %v1421 = vadd.f32 0.0, %v1420
        %v1422 = vpop.f32.mrb[0].mxu0
        %1423 = vmatprep.mubr.f32.mxu0 0.0
        %1424 = vmatmul.mubr.f32.gmra.mrb[0].mxu0 %v1318
        %v1425 = vpop.f32.mrb[0].mxu0
        %v1426 = vadd.f32 0.0, %v1425
        %v1427 = vpop.f32.mrb[0].mxu0
        %1428 = vmatprep.mubr.f32.mxu0 0.0
        %1429 = vmatmul.mubr.f32.gmra.mrb[0].mxu0 %v1319
        %v1430 = vpop.f32.mrb[0].mxu0
        %v1431 = vadd.f32 0.0, %v1430
        %v1432 = vpop.f32.mrb[0].mxu0
        %1433 = vmatprep.mubr.f32.mxu0 0.0
        %1434 = vmatmul.mubr.f32.gmra.mrb[0].mxu0 %v1320
        %v1435 = vpop.f32.mrb[0].mxu0
        %v1436 = vadd.f32 0.0, %v1435
        %v1437 = vpop.f32.mrb[0].mxu0
        %1438 = vmatprep.mubr.f32.mxu0 0.0
        %1439 = vmatmul.mubr.f32.gmra.mrb[0].mxu0 %v1321
        %v1440 = vpop.f32.mrb[0].mxu0
        %v1441 = vadd.f32 0.0, %v1440
        %v1442 = vpop.f32.mrb[0].mxu0
        %1443 = vdwg.mxu0
        %v1444 = vadd.f32 %v1276, %v1406
        %v1445 = vadd.f32 %v1281, %v1411
        %v1446 = vadd.f32 %v1286, %v1416
        %v1447 = vadd.f32 %v1291, %v1421
        %v1448 = vadd.f32 %v1296, %v1426
        %v1449 = vadd.f32 %v1301, %v1431
        %v1450 = vadd.f32 %v1306, %v1436
        %v1451 = vadd.f32 %v1311, %v1441
        %v1452 = vld [vmem:[%s1046] sm:$0xff]
        %v1453 = vld [vmem:[%s1046 + $0x10] sm:$0xff]
        %v1454 = vld [vmem:[%s1046 + $0x20] sm:$0xff]
        %v1455 = vld [vmem:[%s1046 + $0x30] sm:$0xff]
        %v1456 = vld [vmem:[%s1046 + $0x40] sm:$0xff]
        %v1457 = vld [vmem:[%s1046 + $0x50] sm:$0xff]
        %v1458 = vld [vmem:[%s1046 + $0x60] sm:$0xff]
        %v1459 = vld [vmem:[%s1046 + $0x70] sm:$0xff]
        %s1460 = scalar_lea.vmem [#allocation8], 384
        %v1461 = vld [vmem:[%s1460] sm:$0xff]
        %v1462 = vld [vmem:[%s1460 + $0x8] sm:$0xff]
        %v1463 = vld [vmem:[%s1460 + $0x10] sm:$0xff]
        %v1464 = vld [vmem:[%s1460 + $0x18] sm:$0xff]
        %v1465 = vld [vmem:[%s1460 + $0x20] sm:$0xff]
        %v1466 = vld [vmem:[%s1460 + $0x28] sm:$0xff]
        %v1467 = vld [vmem:[%s1460 + $0x30] sm:$0xff]
        %v1468 = vld [vmem:[%s1460 + $0x38] sm:$0xff]
        %v1469 = vld [vmem:[%s1460 + $0x40] sm:$0xff]
        %v1470 = vld [vmem:[%s1460 + $0x48] sm:$0xff]
        %v1471 = vld [vmem:[%s1460 + $0x50] sm:$0xff]
        %v1472 = vld [vmem:[%s1460 + $0x58] sm:$0xff]
        %v1473 = vld [vmem:[%s1460 + $0x60] sm:$0xff]
        %v1474 = vld [vmem:[%s1460 + $0x68] sm:$0xff]
        %v1475 = vld [vmem:[%s1460 + $0x70] sm:$0xff]
        %v1476 = vld [vmem:[%s1460 + $0x78] sm:$0xff]
        %1477 = vmatprep.subr.mxu0 0.0
        %1478 = vmatpush1.msra.mxu0 %v1461
        %1479 = vmatprep.subr.mxu0 0.0
        %1480 = vmatpush1.msra.mxu0 %v1462
        %1481 = vmatprep.subr.mxu0 0.0
        %1482 = vmatpush1.msra.mxu0 %v1463
        %1483 = vmatprep.subr.mxu0 0.0
        %1484 = vmatpush1.msra.mxu0 %v1464
        %1485 = vmatprep.subr.mxu0 0.0
        %1486 = vmatpush1.msra.mxu0 %v1465
        %1487 = vmatprep.subr.mxu0 0.0
        %1488 = vmatpush1.msra.mxu0 %v1466
        %1489 = vmatprep.subr.mxu0 0.0
        %1490 = vmatpush1.msra.mxu0 %v1467
        %1491 = vmatprep.subr.mxu0 0.0
        %1492 = vmatpush1.msra.mxu0 %v1468
        %1493 = vmatprep.subr.mxu0 0.0
        %1494 = vmatpush1.msra.mxu0 %v1469
        %1495 = vmatprep.subr.mxu0 0.0
        %1496 = vmatpush1.msra.mxu0 %v1470
        %1497 = vmatprep.subr.mxu0 0.0
        %1498 = vmatpush1.msra.mxu0 %v1471
        %1499 = vmatprep.subr.mxu0 0.0
        %1500 = vmatpush1.msra.mxu0 %v1472
        %1501 = vmatprep.subr.mxu0 0.0
        %1502 = vmatpush1.msra.mxu0 %v1473
        %1503 = vmatprep.subr.mxu0 0.0
        %1504 = vmatpush1.msra.mxu0 %v1474
        %1505 = vmatprep.subr.mxu0 0.0
        %1506 = vmatpush1.msra.mxu0 %v1475
        %1507 = vmatprep.subr.mxu0 0.0
        %1508 = vmatpush1.msra.mxu0 %v1476
        %1509 = vmatprep.subr.mxu0 0.0
        %1510 = vmatpush1.msra.mxu0 0.0
        %1511 = vmatprep.subr.mxu0 0.0
        %1512 = vmatpush1.msra.mxu0 0.0
        %1513 = vmatprep.subr.mxu0 0.0
        %1514 = vmatpush1.msra.mxu0 0.0
        %1515 = vmatprep.subr.mxu0 0.0
        %1516 = vmatpush1.msra.mxu0 0.0
        %1517 = vmatprep.subr.mxu0 0.0
        %1518 = vmatpush1.msra.mxu0 0.0
        %1519 = vmatprep.subr.mxu0 0.0
        %1520 = vmatpush1.msra.mxu0 0.0
        %1521 = vmatprep.subr.mxu0 0.0
        %1522 = vmatpush1.msra.mxu0 0.0
        %1523 = vmatprep.subr.mxu0 0.0
        %1524 = vmatpush1.msra.mxu0 0.0
        %1525 = vmatprep.subr.mxu0 0.0
        %1526 = vmatpush1.msra.mxu0 0.0
        %1527 = vmatprep.subr.mxu0 0.0
        %1528 = vmatpush1.msra.mxu0 0.0
        %1529 = vmatprep.subr.mxu0 0.0
        %1530 = vmatpush1.msra.mxu0 0.0
        %1531 = vmatprep.subr.mxu0 0.0
        %1532 = vmatpush1.msra.mxu0 0.0
        %1533 = vmatprep.subr.mxu0 0.0
        %1534 = vmatpush1.msra.mxu0 0.0
        %1535 = vmatprep.subr.mxu0 0.0
        %1536 = vmatpush1.msra.mxu0 0.0
        %1537 = vmatprep.subr.mxu0 0.0
        %1538 = vmatpush1.msra.mxu0 0.0
        %1539 = vmatprep.subr.mxu0 0.0
        %1540 = vmatpush1.msra.mxu0 0.0
        %1541 = vmatprep.mubr.f32.mxu0 0.0
        %1542 = vmatmul.mubr.f32.gmra.mrb[0].mxu0 %v1452
        %v1543 = vpop.f32.mrb[0].mxu0
        %v1544 = vadd.f32 0.0, %v1543
        %v1545 = vpop.f32.mrb[0].mxu0
        %1546 = vmatprep.mubr.f32.mxu0 0.0
        %1547 = vmatmul.mubr.f32.gmra.mrb[0].mxu0 %v1453
        %v1548 = vpop.f32.mrb[0].mxu0
        %v1549 = vadd.f32 0.0, %v1548
        %v1550 = vpop.f32.mrb[0].mxu0
        %1551 = vmatprep.mubr.f32.mxu0 0.0
        %1552 = vmatmul.mubr.f32.gmra.mrb[0].mxu0 %v1454
        %v1553 = vpop.f32.mrb[0].mxu0
        %v1554 = vadd.f32 0.0, %v1553
        %v1555 = vpop.f32.mrb[0].mxu0
        %1556 = vmatprep.mubr.f32.mxu0 0.0
        %1557 = vmatmul.mubr.f32.gmra.mrb[0].mxu0 %v1455
        %v1558 = vpop.f32.mrb[0].mxu0
        %v1559 = vadd.f32 0.0, %v1558
        %v1560 = vpop.f32.mrb[0].mxu0
        %1561 = vmatprep.mubr.f32.mxu0 0.0
        %1562 = vmatmul.mubr.f32.gmra.mrb[0].mxu0 %v1456
        %v1563 = vpop.f32.mrb[0].mxu0
        %v1564 = vadd.f32 0.0, %v1563
        %v1565 = vpop.f32.mrb[0].mxu0
        %1566 = vmatprep.mubr.f32.mxu0 0.0
        %1567 = vmatmul.mubr.f32.gmra.mrb[0].mxu0 %v1457
        %v1568 = vpop.f32.mrb[0].mxu0
        %v1569 = vadd.f32 0.0, %v1568
        %v1570 = vpop.f32.mrb[0].mxu0
        %1571 = vmatprep.mubr.f32.mxu0 0.0
        %1572 = vmatmul.mubr.f32.gmra.mrb[0].mxu0 %v1458
        %v1573 = vpop.f32.mrb[0].mxu0
        %v1574 = vadd.f32 0.0, %v1573
        %v1575 = vpop.f32.mrb[0].mxu0
        %1576 = vmatprep.mubr.f32.mxu0 0.0
        %1577 = vmatmul.mubr.f32.gmra.mrb[0].mxu0 %v1459
        %v1578 = vpop.f32.mrb[0].mxu0
        %v1579 = vadd.f32 0.0, %v1578
        %v1580 = vpop.f32.mrb[0].mxu0
        %1581 = vdwg.mxu0
        %v1582 = vadd.f32 %v1444, %v1544
        %v1583 = vadd.f32 %v1445, %v1549
        %v1584 = vadd.f32 %v1446, %v1554
        %v1585 = vadd.f32 %v1447, %v1559
        %v1586 = vadd.f32 %v1448, %v1564
        %v1587 = vadd.f32 %v1449, %v1569
        %v1588 = vadd.f32 %v1450, %v1574
        %v1589 = vadd.f32 %v1451, %v1579
        %v1590 = vld [vmem:[%s1046 + $0x1] sm:$0xff]
        %v1591 = vld [vmem:[%s1046 + $0x11] sm:$0xff]
        %v1592 = vld [vmem:[%s1046 + $0x21] sm:$0xff]
        %v1593 = vld [vmem:[%s1046 + $0x31] sm:$0xff]
        %v1594 = vld [vmem:[%s1046 + $0x41] sm:$0xff]
        %v1595 = vld [vmem:[%s1046 + $0x51] sm:$0xff]
        %v1596 = vld [vmem:[%s1046 + $0x61] sm:$0xff]
        %v1597 = vld [vmem:[%s1046 + $0x71] sm:$0xff]
        %s1598 = scalar_lea.vmem [#allocation8], 512
        %v1599 = vld [vmem:[%s1598] sm:$0xff]
        %v1600 = vld [vmem:[%s1598 + $0x8] sm:$0xff]
        %v1601 = vld [vmem:[%s1598 + $0x10] sm:$0xff]
        %v1602 = vld [vmem:[%s1598 + $0x18] sm:$0xff]
        %v1603 = vld [vmem:[%s1598 + $0x20] sm:$0xff]
        %v1604 = vld [vmem:[%s1598 + $0x28] sm:$0xff]
        %v1605 = vld [vmem:[%s1598 + $0x30] sm:$0xff]
        %v1606 = vld [vmem:[%s1598 + $0x38] sm:$0xff]
        %v1607 = vld [vmem:[%s1598 + $0x40] sm:$0xff]
        %v1608 = vld [vmem:[%s1598 + $0x48] sm:$0xff]
        %v1609 = vld [vmem:[%s1598 + $0x50] sm:$0xff]
        %v1610 = vld [vmem:[%s1598 + $0x58] sm:$0xff]
        %v1611 = vld [vmem:[%s1598 + $0x60] sm:$0xff]
        %v1612 = vld [vmem:[%s1598 + $0x68] sm:$0xff]
        %v1613 = vld [vmem:[%s1598 + $0x70] sm:$0xff]
        %v1614 = vld [vmem:[%s1598 + $0x78] sm:$0xff]
        %1615 = vmatprep.subr.mxu0 0.0
        %1616 = vmatpush1.msra.mxu0 %v1599
        %1617 = vmatprep.subr.mxu0 0.0
        %1618 = vmatpush1.msra.mxu0 %v1600
        %1619 = vmatprep.subr.mxu0 0.0
        %1620 = vmatpush1.msra.mxu0 %v1601
        %1621 = vmatprep.subr.mxu0 0.0
        %1622 = vmatpush1.msra.mxu0 %v1602
        %1623 = vmatprep.subr.mxu0 0.0
        %1624 = vmatpush1.msra.mxu0 %v1603
        %1625 = vmatprep.subr.mxu0 0.0
        %1626 = vmatpush1.msra.mxu0 %v1604
        %1627 = vmatprep.subr.mxu0 0.0
        %1628 = vmatpush1.msra.mxu0 %v1605
        %1629 = vmatprep.subr.mxu0 0.0
        %1630 = vmatpush1.msra.mxu0 %v1606
        %1631 = vmatprep.subr.mxu0 0.0
        %1632 = vmatpush1.msra.mxu0 %v1607
        %1633 = vmatprep.subr.mxu0 0.0
        %1634 = vmatpush1.msra.mxu0 %v1608
        %1635 = vmatprep.subr.mxu0 0.0
        %1636 = vmatpush1.msra.mxu0 %v1609
        %1637 = vmatprep.subr.mxu0 0.0
        %1638 = vmatpush1.msra.mxu0 %v1610
        %1639 = vmatprep.subr.mxu0 0.0
        %1640 = vmatpush1.msra.mxu0 %v1611
        %1641 = vmatprep.subr.mxu0 0.0
        %1642 = vmatpush1.msra.mxu0 %v1612
        %1643 = vmatprep.subr.mxu0 0.0
        %1644 = vmatpush1.msra.mxu0 %v1613
        %1645 = vmatprep.subr.mxu0 0.0
        %1646 = vmatpush1.msra.mxu0 %v1614
        %1647 = vmatprep.subr.mxu0 0.0
        %1648 = vmatpush1.msra.mxu0 0.0
        %1649 = vmatprep.subr.mxu0 0.0
        %1650 = vmatpush1.msra.mxu0 0.0
        %1651 = vmatprep.subr.mxu0 0.0
        %1652 = vmatpush1.msra.mxu0 0.0
        %1653 = vmatprep.subr.mxu0 0.0
        %1654 = vmatpush1.msra.mxu0 0.0
        %1655 = vmatprep.subr.mxu0 0.0
        %1656 = vmatpush1.msra.mxu0 0.0
        %1657 = vmatprep.subr.mxu0 0.0
        %1658 = vmatpush1.msra.mxu0 0.0
        %1659 = vmatprep.subr.mxu0 0.0
        %1660 = vmatpush1.msra.mxu0 0.0
        %1661 = vmatprep.subr.mxu0 0.0
        %1662 = vmatpush1.msra.mxu0 0.0
        %1663 = vmatprep.subr.mxu0 0.0
        %1664 = vmatpush1.msra.mxu0 0.0
        %1665 = vmatprep.subr.mxu0 0.0
        %1666 = vmatpush1.msra.mxu0 0.0
        %1667 = vmatprep.subr.mxu0 0.0
        %1668 = vmatpush1.msra.mxu0 0.0
        %1669 = vmatprep.subr.mxu0 0.0
        %1670 = vmatpush1.msra.mxu0 0.0
        %1671 = vmatprep.subr.mxu0 0.0
        %1672 = vmatpush1.msra.mxu0 0.0
        %1673 = vmatprep.subr.mxu0 0.0
        %1674 = vmatpush1.msra.mxu0 0.0
        %1675 = vmatprep.subr.mxu0 0.0
        %1676 = vmatpush1.msra.mxu0 0.0
        %1677 = vmatprep.subr.mxu0 0.0
        %1678 = vmatpush1.msra.mxu0 0.0
        %1679 = vmatprep.mubr.f32.mxu0 0.0
        %1680 = vmatmul.mubr.f32.gmra.mrb[0].mxu0 %v1590
        %v1681 = vpop.f32.mrb[0].mxu0
        %v1682 = vadd.f32 0.0, %v1681
        %v1683 = vpop.f32.mrb[0].mxu0
        %1684 = vmatprep.mubr.f32.mxu0 0.0
        %1685 = vmatmul.mubr.f32.gmra.mrb[0].mxu0 %v1591
        %v1686 = vpop.f32.mrb[0].mxu0
        %v1687 = vadd.f32 0.0, %v1686
        %v1688 = vpop.f32.mrb[0].mxu0
        %1689 = vmatprep.mubr.f32.mxu0 0.0
        %1690 = vmatmul.mubr.f32.gmra.mrb[0].mxu0 %v1592
        %v1691 = vpop.f32.mrb[0].mxu0
        %v1692 = vadd.f32 0.0, %v1691
        %v1693 = vpop.f32.mrb[0].mxu0
        %1694 = vmatprep.mubr.f32.mxu0 0.0
        %1695 = vmatmul.mubr.f32.gmra.mrb[0].mxu0 %v1593
        %v1696 = vpop.f32.mrb[0].mxu0
        %v1697 = vadd.f32 0.0, %v1696
        %v1698 = vpop.f32.mrb[0].mxu0
        %1699 = vmatprep.mubr.f32.mxu0 0.0
        %1700 = vmatmul.mubr.f32.gmra.mrb[0].mxu0 %v1594
        %v1701 = vpop.f32.mrb[0].mxu0
        %v1702 = vadd.f32 0.0, %v1701
        %v1703 = vpop.f32.mrb[0].mxu0
        %1704 = vmatprep.mubr.f32.mxu0 0.0
        %1705 = vmatmul.mubr.f32.gmra.mrb[0].mxu0 %v1595
        %v1706 = vpop.f32.mrb[0].mxu0
        %v1707 = vadd.f32 0.0, %v1706
        %v1708 = vpop.f32.mrb[0].mxu0
        %1709 = vmatprep.mubr.f32.mxu0 0.0
        %1710 = vmatmul.mubr.f32.gmra.mrb[0].mxu0 %v1596
        %v1711 = vpop.f32.mrb[0].mxu0
        %v1712 = vadd.f32 0.0, %v1711
        %v1713 = vpop.f32.mrb[0].mxu0
        %1714 = vmatprep.mubr.f32.mxu0 0.0
        %1715 = vmatmul.mubr.f32.gmra.mrb[0].mxu0 %v1597
        %v1716 = vpop.f32.mrb[0].mxu0
        %v1717 = vadd.f32 0.0, %v1716
        %v1718 = vpop.f32.mrb[0].mxu0
        %1719 = vdwg.mxu0
        %v1720 = vadd.f32 %v1582, %v1682
        %v1721 = vadd.f32 %v1583, %v1687
        %v1722 = vadd.f32 %v1584, %v1692
        %v1723 = vadd.f32 %v1585, %v1697
        %v1724 = vadd.f32 %v1586, %v1702
        %v1725 = vadd.f32 %v1587, %v1707
        %v1726 = vadd.f32 %v1588, %v1712
        %v1727 = vadd.f32 %v1589, %v1717
        %v1728 = vld [vmem:[%s1046 + $0x2] sm:$0xff]
        %v1729 = vld [vmem:[%s1046 + $0x12] sm:$0xff]
        %v1730 = vld [vmem:[%s1046 + $0x22] sm:$0xff]
        %v1731 = vld [vmem:[%s1046 + $0x32] sm:$0xff]
        %v1732 = vld [vmem:[%s1046 + $0x42] sm:$0xff]
        %v1733 = vld [vmem:[%s1046 + $0x52] sm:$0xff]
        %v1734 = vld [vmem:[%s1046 + $0x62] sm:$0xff]
        %v1735 = vld [vmem:[%s1046 + $0x72] sm:$0xff]
        %s1736 = scalar_lea.vmem [#allocation8], 640
        %v1737 = vld [vmem:[%s1736] sm:$0xff]
        %v1738 = vld [vmem:[%s1736 + $0x8] sm:$0xff]
        %v1739 = vld [vmem:[%s1736 + $0x10] sm:$0xff]
        %v1740 = vld [vmem:[%s1736 + $0x18] sm:$0xff]
        %v1741 = vld [vmem:[%s1736 + $0x20] sm:$0xff]
        %v1742 = vld [vmem:[%s1736 + $0x28] sm:$0xff]
        %v1743 = vld [vmem:[%s1736 + $0x30] sm:$0xff]
        %v1744 = vld [vmem:[%s1736 + $0x38] sm:$0xff]
        %v1745 = vld [vmem:[%s1736 + $0x40] sm:$0xff]
        %v1746 = vld [vmem:[%s1736 + $0x48] sm:$0xff]
        %v1747 = vld [vmem:[%s1736 + $0x50] sm:$0xff]
        %v1748 = vld [vmem:[%s1736 + $0x58] sm:$0xff]
        %v1749 = vld [vmem:[%s1736 + $0x60] sm:$0xff]
        %v1750 = vld [vmem:[%s1736 + $0x68] sm:$0xff]
        %v1751 = vld [vmem:[%s1736 + $0x70] sm:$0xff]
        %v1752 = vld [vmem:[%s1736 + $0x78] sm:$0xff]
        %1753 = vmatprep.subr.mxu0 0.0
        %1754 = vmatpush1.msra.mxu0 %v1737
        %1755 = vmatprep.subr.mxu0 0.0
        %1756 = vmatpush1.msra.mxu0 %v1738
        %1757 = vmatprep.subr.mxu0 0.0
        %1758 = vmatpush1.msra.mxu0 %v1739
        %1759 = vmatprep.subr.mxu0 0.0
        %1760 = vmatpush1.msra.mxu0 %v1740
        %1761 = vmatprep.subr.mxu0 0.0
        %1762 = vmatpush1.msra.mxu0 %v1741
        %1763 = vmatprep.subr.mxu0 0.0
        %1764 = vmatpush1.msra.mxu0 %v1742
        %1765 = vmatprep.subr.mxu0 0.0
        %1766 = vmatpush1.msra.mxu0 %v1743
        %1767 = vmatprep.subr.mxu0 0.0
        %1768 = vmatpush1.msra.mxu0 %v1744
        %1769 = vmatprep.subr.mxu0 0.0
        %1770 = vmatpush1.msra.mxu0 %v1745
        %1771 = vmatprep.subr.mxu0 0.0
        %1772 = vmatpush1.msra.mxu0 %v1746
        %1773 = vmatprep.subr.mxu0 0.0
        %1774 = vmatpush1.msra.mxu0 %v1747
        %1775 = vmatprep.subr.mxu0 0.0
        %1776 = vmatpush1.msra.mxu0 %v1748
        %1777 = vmatprep.subr.mxu0 0.0
        %1778 = vmatpush1.msra.mxu0 %v1749
        %1779 = vmatprep.subr.mxu0 0.0
        %1780 = vmatpush1.msra.mxu0 %v1750
        %1781 = vmatprep.subr.mxu0 0.0
        %1782 = vmatpush1.msra.mxu0 %v1751
        %1783 = vmatprep.subr.mxu0 0.0
        %1784 = vmatpush1.msra.mxu0 %v1752
        %1785 = vmatprep.subr.mxu0 0.0
        %1786 = vmatpush1.msra.mxu0 0.0
        %1787 = vmatprep.subr.mxu0 0.0
        %1788 = vmatpush1.msra.mxu0 0.0
        %1789 = vmatprep.subr.mxu0 0.0
        %1790 = vmatpush1.msra.mxu0 0.0
        %1791 = vmatprep.subr.mxu0 0.0
        %1792 = vmatpush1.msra.mxu0 0.0
        %1793 = vmatprep.subr.mxu0 0.0
        %1794 = vmatpush1.msra.mxu0 0.0
        %1795 = vmatprep.subr.mxu0 0.0
        %1796 = vmatpush1.msra.mxu0 0.0
        %1797 = vmatprep.subr.mxu0 0.0
        %1798 = vmatpush1.msra.mxu0 0.0
        %1799 = vmatprep.subr.mxu0 0.0
        %1800 = vmatpush1.msra.mxu0 0.0
        %1801 = vmatprep.subr.mxu0 0.0
        %1802 = vmatpush1.msra.mxu0 0.0
        %1803 = vmatprep.subr.mxu0 0.0
        %1804 = vmatpush1.msra.mxu0 0.0
        %1805 = vmatprep.subr.mxu0 0.0
        %1806 = vmatpush1.msra.mxu0 0.0
        %1807 = vmatprep.subr.mxu0 0.0
        %1808 = vmatpush1.msra.mxu0 0.0
        %1809 = vmatprep.subr.mxu0 0.0
        %1810 = vmatpush1.msra.mxu0 0.0
        %1811 = vmatprep.subr.mxu0 0.0
        %1812 = vmatpush1.msra.mxu0 0.0
        %1813 = vmatprep.subr.mxu0 0.0
        %1814 = vmatpush1.msra.mxu0 0.0
        %1815 = vmatprep.subr.mxu0 0.0
        %1816 = vmatpush1.msra.mxu0 0.0
        %1817 = vmatprep.mubr.f32.mxu0 0.0
        %1818 = vmatmul.mubr.f32.gmra.mrb[0].mxu0 %v1728
        %v1819 = vpop.f32.mrb[0].mxu0
        %v1820 = vadd.f32 0.0, %v1819
        %v1821 = vpop.f32.mrb[0].mxu0
        %1822 = vmatprep.mubr.f32.mxu0 0.0
        %1823 = vmatmul.mubr.f32.gmra.mrb[0].mxu0 %v1729
        %v1824 = vpop.f32.mrb[0].mxu0
        %v1825 = vadd.f32 0.0, %v1824
        %v1826 = vpop.f32.mrb[0].mxu0
        %1827 = vmatprep.mubr.f32.mxu0 0.0
        %1828 = vmatmul.mubr.f32.gmra.mrb[0].mxu0 %v1730
        %v1829 = vpop.f32.mrb[0].mxu0
        %v1830 = vadd.f32 0.0, %v1829
        %v1831 = vpop.f32.mrb[0].mxu0
        %1832 = vmatprep.mubr.f32.mxu0 0.0
        %1833 = vmatmul.mubr.f32.gmra.mrb[0].mxu0 %v1731
        %v1834 = vpop.f32.mrb[0].mxu0
        %v1835 = vadd.f32 0.0, %v1834
        %v1836 = vpop.f32.mrb[0].mxu0
        %1837 = vmatprep.mubr.f32.mxu0 0.0
        %1838 = vmatmul.mubr.f32.gmra.mrb[0].mxu0 %v1732
        %v1839 = vpop.f32.mrb[0].mxu0
        %v1840 = vadd.f32 0.0, %v1839
        %v1841 = vpop.f32.mrb[0].mxu0
        %1842 = vmatprep.mubr.f32.mxu0 0.0
        %1843 = vmatmul.mubr.f32.gmra.mrb[0].mxu0 %v1733
        %v1844 = vpop.f32.mrb[0].mxu0
        %v1845 = vadd.f32 0.0, %v1844
        %v1846 = vpop.f32.mrb[0].mxu0
        %1847 = vmatprep.mubr.f32.mxu0 0.0
        %1848 = vmatmul.mubr.f32.gmra.mrb[0].mxu0 %v1734
        %v1849 = vpop.f32.mrb[0].mxu0
        %v1850 = vadd.f32 0.0, %v1849
        %v1851 = vpop.f32.mrb[0].mxu0
        %1852 = vmatprep.mubr.f32.mxu0 0.0
        %1853 = vmatmul.mubr.f32.gmra.mrb[0].mxu0 %v1735
        %v1854 = vpop.f32.mrb[0].mxu0
        %v1855 = vadd.f32 0.0, %v1854
        %v1856 = vpop.f32.mrb[0].mxu0
        %1857 = vdwg.mxu0
        %v1858 = vadd.f32 %v1720, %v1820
        %v1859 = vadd.f32 %v1721, %v1825
        %v1860 = vadd.f32 %v1722, %v1830
        %v1861 = vadd.f32 %v1723, %v1835
        %v1862 = vadd.f32 %v1724, %v1840
        %v1863 = vadd.f32 %v1725, %v1845
        %v1864 = vadd.f32 %v1726, %v1850
        %v1865 = vadd.f32 %v1727, %v1855
        %s1866 = scalar_lea.vmem [#allocation2], 32
        %v1867 = vld [vmem:[%s1866] sm:$0xff]
        %v1868 = vld [vmem:[%s1866 + $0x10] sm:$0xff]
        %v1869 = vld [vmem:[%s1866 + $0x20] sm:$0xff]
        %v1870 = vld [vmem:[%s1866 + $0x30] sm:$0xff]
        %v1871 = vld [vmem:[%s1866 + $0x40] sm:$0xff]
        %v1872 = vld [vmem:[%s1866 + $0x50] sm:$0xff]
        %v1873 = vld [vmem:[%s1866 + $0x60] sm:$0xff]
        %v1874 = vld [vmem:[%s1866 + $0x70] sm:$0xff]
        %s1875 = scalar_lea.vmem [#allocation8], 768
        %v1876 = vld [vmem:[%s1875] sm:$0xff]
        %v1877 = vld [vmem:[%s1875 + $0x8] sm:$0xff]
        %v1878 = vld [vmem:[%s1875 + $0x10] sm:$0xff]
        %v1879 = vld [vmem:[%s1875 + $0x18] sm:$0xff]
        %v1880 = vld [vmem:[%s1875 + $0x20] sm:$0xff]
        %v1881 = vld [vmem:[%s1875 + $0x28] sm:$0xff]
        %v1882 = vld [vmem:[%s1875 + $0x30] sm:$0xff]
        %v1883 = vld [vmem:[%s1875 + $0x38] sm:$0xff]
        %v1884 = vld [vmem:[%s1875 + $0x40] sm:$0xff]
        %v1885 = vld [vmem:[%s1875 + $0x48] sm:$0xff]
        %v1886 = vld [vmem:[%s1875 + $0x50] sm:$0xff]
        %v1887 = vld [vmem:[%s1875 + $0x58] sm:$0xff]
        %v1888 = vld [vmem:[%s1875 + $0x60] sm:$0xff]
        %v1889 = vld [vmem:[%s1875 + $0x68] sm:$0xff]
        %v1890 = vld [vmem:[%s1875 + $0x70] sm:$0xff]
        %v1891 = vld [vmem:[%s1875 + $0x78] sm:$0xff]
        %1892 = vmatprep.subr.mxu0 0.0
        %1893 = vmatpush1.msra.mxu0 %v1876
        %1894 = vmatprep.subr.mxu0 0.0
        %1895 = vmatpush1.msra.mxu0 %v1877
        %1896 = vmatprep.subr.mxu0 0.0
        %1897 = vmatpush1.msra.mxu0 %v1878
        %1898 = vmatprep.subr.mxu0 0.0
        %1899 = vmatpush1.msra.mxu0 %v1879
        %1900 = vmatprep.subr.mxu0 0.0
        %1901 = vmatpush1.msra.mxu0 %v1880
        %1902 = vmatprep.subr.mxu0 0.0
        %1903 = vmatpush1.msra.mxu0 %v1881
        %1904 = vmatprep.subr.mxu0 0.0
        %1905 = vmatpush1.msra.mxu0 %v1882
        %1906 = vmatprep.subr.mxu0 0.0
        %1907 = vmatpush1.msra.mxu0 %v1883
        %1908 = vmatprep.subr.mxu0 0.0
        %1909 = vmatpush1.msra.mxu0 %v1884
        %1910 = vmatprep.subr.mxu0 0.0
        %1911 = vmatpush1.msra.mxu0 %v1885
        %1912 = vmatprep.subr.mxu0 0.0
        %1913 = vmatpush1.msra.mxu0 %v1886
        %1914 = vmatprep.subr.mxu0 0.0
        %1915 = vmatpush1.msra.mxu0 %v1887
        %1916 = vmatprep.subr.mxu0 0.0
        %1917 = vmatpush1.msra.mxu0 %v1888
        %1918 = vmatprep.subr.mxu0 0.0
        %1919 = vmatpush1.msra.mxu0 %v1889
        %1920 = vmatprep.subr.mxu0 0.0
        %1921 = vmatpush1.msra.mxu0 %v1890
        %1922 = vmatprep.subr.mxu0 0.0
        %1923 = vmatpush1.msra.mxu0 %v1891
        %1924 = vmatprep.subr.mxu0 0.0
        %1925 = vmatpush1.msra.mxu0 0.0
        %1926 = vmatprep.subr.mxu0 0.0
        %1927 = vmatpush1.msra.mxu0 0.0
        %1928 = vmatprep.subr.mxu0 0.0
        %1929 = vmatpush1.msra.mxu0 0.0
        %1930 = vmatprep.subr.mxu0 0.0
        %1931 = vmatpush1.msra.mxu0 0.0
        %1932 = vmatprep.subr.mxu0 0.0
        %1933 = vmatpush1.msra.mxu0 0.0
        %1934 = vmatprep.subr.mxu0 0.0
        %1935 = vmatpush1.msra.mxu0 0.0
        %1936 = vmatprep.subr.mxu0 0.0
        %1937 = vmatpush1.msra.mxu0 0.0
        %1938 = vmatprep.subr.mxu0 0.0
        %1939 = vmatpush1.msra.mxu0 0.0
        %1940 = vmatprep.subr.mxu0 0.0
        %1941 = vmatpush1.msra.mxu0 0.0
        %1942 = vmatprep.subr.mxu0 0.0
        %1943 = vmatpush1.msra.mxu0 0.0
        %1944 = vmatprep.subr.mxu0 0.0
        %1945 = vmatpush1.msra.mxu0 0.0
        %1946 = vmatprep.subr.mxu0 0.0
        %1947 = vmatpush1.msra.mxu0 0.0
        %1948 = vmatprep.subr.mxu0 0.0
        %1949 = vmatpush1.msra.mxu0 0.0
        %1950 = vmatprep.subr.mxu0 0.0
        %1951 = vmatpush1.msra.mxu0 0.0
        %1952 = vmatprep.subr.mxu0 0.0
        %1953 = vmatpush1.msra.mxu0 0.0
        %1954 = vmatprep.subr.mxu0 0.0
        %1955 = vmatpush1.msra.mxu0 0.0
        %1956 = vmatprep.mubr.f32.mxu0 0.0
        %1957 = vmatmul.mubr.f32.gmra.mrb[0].mxu0 %v1867
        %v1958 = vpop.f32.mrb[0].mxu0
        %v1959 = vadd.f32 0.0, %v1958
        %v1960 = vpop.f32.mrb[0].mxu0
        %1961 = vmatprep.mubr.f32.mxu0 0.0
        %1962 = vmatmul.mubr.f32.gmra.mrb[0].mxu0 %v1868
        %v1963 = vpop.f32.mrb[0].mxu0
        %v1964 = vadd.f32 0.0, %v1963
        %v1965 = vpop.f32.mrb[0].mxu0
        %1966 = vmatprep.mubr.f32.mxu0 0.0
        %1967 = vmatmul.mubr.f32.gmra.mrb[0].mxu0 %v1869
        %v1968 = vpop.f32.mrb[0].mxu0
        %v1969 = vadd.f32 0.0, %v1968
        %v1970 = vpop.f32.mrb[0].mxu0
        %1971 = vmatprep.mubr.f32.mxu0 0.0
        %1972 = vmatmul.mubr.f32.gmra.mrb[0].mxu0 %v1870
        %v1973 = vpop.f32.mrb[0].mxu0
        %v1974 = vadd.f32 0.0, %v1973
        %v1975 = vpop.f32.mrb[0].mxu0
        %1976 = vmatprep.mubr.f32.mxu0 0.0
        %1977 = vmatmul.mubr.f32.gmra.mrb[0].mxu0 %v1871
        %v1978 = vpop.f32.mrb[0].mxu0
        %v1979 = vadd.f32 0.0, %v1978
        %v1980 = vpop.f32.mrb[0].mxu0
        %1981 = vmatprep.mubr.f32.mxu0 0.0
        %1982 = vmatmul.mubr.f32.gmra.mrb[0].mxu0 %v1872
        %v1983 = vpop.f32.mrb[0].mxu0
        %v1984 = vadd.f32 0.0, %v1983
        %v1985 = vpop.f32.mrb[0].mxu0
        %1986 = vmatprep.mubr.f32.mxu0 0.0
        %1987 = vmatmul.mubr.f32.gmra.mrb[0].mxu0 %v1873
        %v1988 = vpop.f32.mrb[0].mxu0
        %v1989 = vadd.f32 0.0, %v1988
        %v1990 = vpop.f32.mrb[0].mxu0
        %1991 = vmatprep.mubr.f32.mxu0 0.0
        %1992 = vmatmul.mubr.f32.gmra.mrb[0].mxu0 %v1874
        %v1993 = vpop.f32.mrb[0].mxu0
        %v1994 = vadd.f32 0.0, %v1993
        %v1995 = vpop.f32.mrb[0].mxu0
        %1996 = vdwg.mxu0
        %v1997 = vadd.f32 %v1858, %v1959
        %v1998 = vadd.f32 %v1859, %v1964
        %v1999 = vadd.f32 %v1860, %v1969
        %v2000 = vadd.f32 %v1861, %v1974
        %v2001 = vadd.f32 %v1862, %v1979
        %v2002 = vadd.f32 %v1863, %v1984
        %v2003 = vadd.f32 %v1864, %v1989
        %v2004 = vadd.f32 %v1865, %v1994
        %v2005 = vld [vmem:[%s1866 + $0x1] sm:$0xff]
        %v2006 = vld [vmem:[%s1866 + $0x11] sm:$0xff]
        %v2007 = vld [vmem:[%s1866 + $0x21] sm:$0xff]
        %v2008 = vld [vmem:[%s1866 + $0x31] sm:$0xff]
        %v2009 = vld [vmem:[%s1866 + $0x41] sm:$0xff]
        %v2010 = vld [vmem:[%s1866 + $0x51] sm:$0xff]
        %v2011 = vld [vmem:[%s1866 + $0x61] sm:$0xff]
        %v2012 = vld [vmem:[%s1866 + $0x71] sm:$0xff]
        %s2013 = scalar_lea.vmem [#allocation8], 896
        %v2014 = vld [vmem:[%s2013] sm:$0xff]
        %v2015 = vld [vmem:[%s2013 + $0x8] sm:$0xff]
        %v2016 = vld [vmem:[%s2013 + $0x10] sm:$0xff]
        %v2017 = vld [vmem:[%s2013 + $0x18] sm:$0xff]
        %v2018 = vld [vmem:[%s2013 + $0x20] sm:$0xff]
        %v2019 = vld [vmem:[%s2013 + $0x28] sm:$0xff]
        %v2020 = vld [vmem:[%s2013 + $0x30] sm:$0xff]
        %v2021 = vld [vmem:[%s2013 + $0x38] sm:$0xff]
        %v2022 = vld [vmem:[%s2013 + $0x40] sm:$0xff]
        %v2023 = vld [vmem:[%s2013 + $0x48] sm:$0xff]
        %v2024 = vld [vmem:[%s2013 + $0x50] sm:$0xff]
        %v2025 = vld [vmem:[%s2013 + $0x58] sm:$0xff]
        %v2026 = vld [vmem:[%s2013 + $0x60] sm:$0xff]
        %v2027 = vld [vmem:[%s2013 + $0x68] sm:$0xff]
        %v2028 = vld [vmem:[%s2013 + $0x70] sm:$0xff]
        %v2029 = vld [vmem:[%s2013 + $0x78] sm:$0xff]
        %2030 = vmatprep.subr.mxu0 0.0
        %2031 = vmatpush1.msra.mxu0 %v2014
        %2032 = vmatprep.subr.mxu0 0.0
        %2033 = vmatpush1.msra.mxu0 %v2015
        %2034 = vmatprep.subr.mxu0 0.0
        %2035 = vmatpush1.msra.mxu0 %v2016
        %2036 = vmatprep.subr.mxu0 0.0
        %2037 = vmatpush1.msra.mxu0 %v2017
        %2038 = vmatprep.subr.mxu0 0.0
        %2039 = vmatpush1.msra.mxu0 %v2018
        %2040 = vmatprep.subr.mxu0 0.0
        %2041 = vmatpush1.msra.mxu0 %v2019
        %2042 = vmatprep.subr.mxu0 0.0
        %2043 = vmatpush1.msra.mxu0 %v2020
        %2044 = vmatprep.subr.mxu0 0.0
        %2045 = vmatpush1.msra.mxu0 %v2021
        %2046 = vmatprep.subr.mxu0 0.0
        %2047 = vmatpush1.msra.mxu0 %v2022
        %2048 = vmatprep.subr.mxu0 0.0
        %2049 = vmatpush1.msra.mxu0 %v2023
        %2050 = vmatprep.subr.mxu0 0.0
        %2051 = vmatpush1.msra.mxu0 %v2024
        %2052 = vmatprep.subr.mxu0 0.0
        %2053 = vmatpush1.msra.mxu0 %v2025
        %2054 = vmatprep.subr.mxu0 0.0
        %2055 = vmatpush1.msra.mxu0 %v2026
        %2056 = vmatprep.subr.mxu0 0.0
        %2057 = vmatpush1.msra.mxu0 %v2027
        %2058 = vmatprep.subr.mxu0 0.0
        %2059 = vmatpush1.msra.mxu0 %v2028
        %2060 = vmatprep.subr.mxu0 0.0
        %2061 = vmatpush1.msra.mxu0 %v2029
        %2062 = vmatprep.subr.mxu0 0.0
        %2063 = vmatpush1.msra.mxu0 0.0
        %2064 = vmatprep.subr.mxu0 0.0
        %2065 = vmatpush1.msra.mxu0 0.0
        %2066 = vmatprep.subr.mxu0 0.0
        %2067 = vmatpush1.msra.mxu0 0.0
        %2068 = vmatprep.subr.mxu0 0.0
        %2069 = vmatpush1.msra.mxu0 0.0
        %2070 = vmatprep.subr.mxu0 0.0
        %2071 = vmatpush1.msra.mxu0 0.0
        %2072 = vmatprep.subr.mxu0 0.0
        %2073 = vmatpush1.msra.mxu0 0.0
        %2074 = vmatprep.subr.mxu0 0.0
        %2075 = vmatpush1.msra.mxu0 0.0
        %2076 = vmatprep.subr.mxu0 0.0
        %2077 = vmatpush1.msra.mxu0 0.0
        %2078 = vmatprep.subr.mxu0 0.0
        %2079 = vmatpush1.msra.mxu0 0.0
        %2080 = vmatprep.subr.mxu0 0.0
        %2081 = vmatpush1.msra.mxu0 0.0
        %2082 = vmatprep.subr.mxu0 0.0
        %2083 = vmatpush1.msra.mxu0 0.0
        %2084 = vmatprep.subr.mxu0 0.0
        %2085 = vmatpush1.msra.mxu0 0.0
        %2086 = vmatprep.subr.mxu0 0.0
        %2087 = vmatpush1.msra.mxu0 0.0
        %2088 = vmatprep.subr.mxu0 0.0
        %2089 = vmatpush1.msra.mxu0 0.0
        %2090 = vmatprep.subr.mxu0 0.0
        %2091 = vmatpush1.msra.mxu0 0.0
        %2092 = vmatprep.subr.mxu0 0.0
        %2093 = vmatpush1.msra.mxu0 0.0
        %2094 = vmatprep.mubr.f32.mxu0 0.0
        %2095 = vmatmul.mubr.f32.gmra.mrb[0].mxu0 %v2005
        %v2096 = vpop.f32.mrb[0].mxu0
        %v2097 = vadd.f32 0.0, %v2096
        %v2098 = vpop.f32.mrb[0].mxu0
        %2099 = vmatprep.mubr.f32.mxu0 0.0
        %2100 = vmatmul.mubr.f32.gmra.mrb[0].mxu0 %v2006
        %v2101 = vpop.f32.mrb[0].mxu0
        %v2102 = vadd.f32 0.0, %v2101
        %v2103 = vpop.f32.mrb[0].mxu0
        %2104 = vmatprep.mubr.f32.mxu0 0.0
        %2105 = vmatmul.mubr.f32.gmra.mrb[0].mxu0 %v2007
        %v2106 = vpop.f32.mrb[0].mxu0
        %v2107 = vadd.f32 0.0, %v2106
        %v2108 = vpop.f32.mrb[0].mxu0
        %2109 = vmatprep.mubr.f32.mxu0 0.0
        %2110 = vmatmul.mubr.f32.gmra.mrb[0].mxu0 %v2008
        %v2111 = vpop.f32.mrb[0].mxu0
        %v2112 = vadd.f32 0.0, %v2111
        %v2113 = vpop.f32.mrb[0].mxu0
        %2114 = vmatprep.mubr.f32.mxu0 0.0
        %2115 = vmatmul.mubr.f32.gmra.mrb[0].mxu0 %v2009
        %v2116 = vpop.f32.mrb[0].mxu0
        %v2117 = vadd.f32 0.0, %v2116
        %v2118 = vpop.f32.mrb[0].mxu0
        %2119 = vmatprep.mubr.f32.mxu0 0.0
        %2120 = vmatmul.mubr.f32.gmra.mrb[0].mxu0 %v2010
        %v2121 = vpop.f32.mrb[0].mxu0
        %v2122 = vadd.f32 0.0, %v2121
        %v2123 = vpop.f32.mrb[0].mxu0
        %2124 = vmatprep.mubr.f32.mxu0 0.0
        %2125 = vmatmul.mubr.f32.gmra.mrb[0].mxu0 %v2011
        %v2126 = vpop.f32.mrb[0].mxu0
        %v2127 = vadd.f32 0.0, %v2126
        %v2128 = vpop.f32.mrb[0].mxu0
        %2129 = vmatprep.mubr.f32.mxu0 0.0
        %2130 = vmatmul.mubr.f32.gmra.mrb[0].mxu0 %v2012
        %v2131 = vpop.f32.mrb[0].mxu0
        %v2132 = vadd.f32 0.0, %v2131
        %v2133 = vpop.f32.mrb[0].mxu0
        %2134 = vdwg.mxu0
        %v2135 = vadd.f32 %v1997, %v2097
        %v2136 = vadd.f32 %v1998, %v2102
        %v2137 = vadd.f32 %v1999, %v2107
        %v2138 = vadd.f32 %v2000, %v2112
        %v2139 = vadd.f32 %v2001, %v2117
        %v2140 = vadd.f32 %v2002, %v2122
        %v2141 = vadd.f32 %v2003, %v2127
        %v2142 = vadd.f32 %v2004, %v2132
        %v2143 = vld [vmem:[%s1866 + $0x2] sm:$0xff]
        %v2144 = vld [vmem:[%s1866 + $0x12] sm:$0xff]
        %v2145 = vld [vmem:[%s1866 + $0x22] sm:$0xff]
        %v2146 = vld [vmem:[%s1866 + $0x32] sm:$0xff]
        %v2147 = vld [vmem:[%s1866 + $0x42] sm:$0xff]
        %v2148 = vld [vmem:[%s1866 + $0x52] sm:$0xff]
        %v2149 = vld [vmem:[%s1866 + $0x62] sm:$0xff]
        %v2150 = vld [vmem:[%s1866 + $0x72] sm:$0xff]
        %s2151 = scalar_lea.vmem [#allocation8], 1024
        %v2152 = vld [vmem:[%s2151] sm:$0xff]
        %v2153 = vld [vmem:[%s2151 + $0x8] sm:$0xff]
        %v2154 = vld [vmem:[%s2151 + $0x10] sm:$0xff]
        %v2155 = vld [vmem:[%s2151 + $0x18] sm:$0xff]
        %v2156 = vld [vmem:[%s2151 + $0x20] sm:$0xff]
        %v2157 = vld [vmem:[%s2151 + $0x28] sm:$0xff]
        %v2158 = vld [vmem:[%s2151 + $0x30] sm:$0xff]
        %v2159 = vld [vmem:[%s2151 + $0x38] sm:$0xff]
        %v2160 = vld [vmem:[%s2151 + $0x40] sm:$0xff]
        %v2161 = vld [vmem:[%s2151 + $0x48] sm:$0xff]
        %v2162 = vld [vmem:[%s2151 + $0x50] sm:$0xff]
        %v2163 = vld [vmem:[%s2151 + $0x58] sm:$0xff]
        %v2164 = vld [vmem:[%s2151 + $0x60] sm:$0xff]
        %v2165 = vld [vmem:[%s2151 + $0x68] sm:$0xff]
        %v2166 = vld [vmem:[%s2151 + $0x70] sm:$0xff]
        %v2167 = vld [vmem:[%s2151 + $0x78] sm:$0xff]
        %2168 = vmatprep.subr.mxu0 0.0
        %2169 = vmatpush1.msra.mxu0 %v2152
        %2170 = vmatprep.subr.mxu0 0.0
        %2171 = vmatpush1.msra.mxu0 %v2153
        %2172 = vmatprep.subr.mxu0 0.0
        %2173 = vmatpush1.msra.mxu0 %v2154
        %2174 = vmatprep.subr.mxu0 0.0
        %2175 = vmatpush1.msra.mxu0 %v2155
        %2176 = vmatprep.subr.mxu0 0.0
        %2177 = vmatpush1.msra.mxu0 %v2156
        %2178 = vmatprep.subr.mxu0 0.0
        %2179 = vmatpush1.msra.mxu0 %v2157
        %2180 = vmatprep.subr.mxu0 0.0
        %2181 = vmatpush1.msra.mxu0 %v2158
        %2182 = vmatprep.subr.mxu0 0.0
        %2183 = vmatpush1.msra.mxu0 %v2159
        %2184 = vmatprep.subr.mxu0 0.0
        %2185 = vmatpush1.msra.mxu0 %v2160
        %2186 = vmatprep.subr.mxu0 0.0
        %2187 = vmatpush1.msra.mxu0 %v2161
        %2188 = vmatprep.subr.mxu0 0.0
        %2189 = vmatpush1.msra.mxu0 %v2162
        %2190 = vmatprep.subr.mxu0 0.0
        %2191 = vmatpush1.msra.mxu0 %v2163
        %2192 = vmatprep.subr.mxu0 0.0
        %2193 = vmatpush1.msra.mxu0 %v2164
        %2194 = vmatprep.subr.mxu0 0.0
        %2195 = vmatpush1.msra.mxu0 %v2165
        %2196 = vmatprep.subr.mxu0 0.0
        %2197 = vmatpush1.msra.mxu0 %v2166
        %2198 = vmatprep.subr.mxu0 0.0
        %2199 = vmatpush1.msra.mxu0 %v2167
        %2200 = vmatprep.subr.mxu0 0.0
        %2201 = vmatpush1.msra.mxu0 0.0
        %2202 = vmatprep.subr.mxu0 0.0
        %2203 = vmatpush1.msra.mxu0 0.0
        %2204 = vmatprep.subr.mxu0 0.0
        %2205 = vmatpush1.msra.mxu0 0.0
        %2206 = vmatprep.subr.mxu0 0.0
        %2207 = vmatpush1.msra.mxu0 0.0
        %2208 = vmatprep.subr.mxu0 0.0
        %2209 = vmatpush1.msra.mxu0 0.0
        %2210 = vmatprep.subr.mxu0 0.0
        %2211 = vmatpush1.msra.mxu0 0.0
        %2212 = vmatprep.subr.mxu0 0.0
        %2213 = vmatpush1.msra.mxu0 0.0
        %2214 = vmatprep.subr.mxu0 0.0
        %2215 = vmatpush1.msra.mxu0 0.0
        %2216 = vmatprep.subr.mxu0 0.0
        %2217 = vmatpush1.msra.mxu0 0.0
        %2218 = vmatprep.subr.mxu0 0.0
        %2219 = vmatpush1.msra.mxu0 0.0
        %2220 = vmatprep.subr.mxu0 0.0
        %2221 = vmatpush1.msra.mxu0 0.0
        %2222 = vmatprep.subr.mxu0 0.0
        %2223 = vmatpush1.msra.mxu0 0.0
        %2224 = vmatprep.subr.mxu0 0.0
        %2225 = vmatpush1.msra.mxu0 0.0
        %2226 = vmatprep.subr.mxu0 0.0
        %2227 = vmatpush1.msra.mxu0 0.0
        %2228 = vmatprep.subr.mxu0 0.0
        %2229 = vmatpush1.msra.mxu0 0.0
        %2230 = vmatprep.subr.mxu0 0.0
        %2231 = vmatpush1.msra.mxu0 0.0
        %2232 = vmatprep.mubr.f32.mxu0 0.0
        %2233 = vmatmul.mubr.f32.gmra.mrb[0].mxu0 %v2143
        %v2234 = vpop.f32.mrb[0].mxu0
        %v2235 = vadd.f32 0.0, %v2234
        %v2236 = vpop.f32.mrb[0].mxu0
        %2237 = vmatprep.mubr.f32.mxu0 0.0
        %2238 = vmatmul.mubr.f32.gmra.mrb[0].mxu0 %v2144
        %v2239 = vpop.f32.mrb[0].mxu0
        %v2240 = vadd.f32 0.0, %v2239
        %v2241 = vpop.f32.mrb[0].mxu0
        %2242 = vmatprep.mubr.f32.mxu0 0.0
        %2243 = vmatmul.mubr.f32.gmra.mrb[0].mxu0 %v2145
        %v2244 = vpop.f32.mrb[0].mxu0
        %v2245 = vadd.f32 0.0, %v2244
        %v2246 = vpop.f32.mrb[0].mxu0
        %2247 = vmatprep.mubr.f32.mxu0 0.0
        %2248 = vmatmul.mubr.f32.gmra.mrb[0].mxu0 %v2146
        %v2249 = vpop.f32.mrb[0].mxu0
        %v2250 = vadd.f32 0.0, %v2249
        %v2251 = vpop.f32.mrb[0].mxu0
        %2252 = vmatprep.mubr.f32.mxu0 0.0
        %2253 = vmatmul.mubr.f32.gmra.mrb[0].mxu0 %v2147
        %v2254 = vpop.f32.mrb[0].mxu0
        %v2255 = vadd.f32 0.0, %v2254
        %v2256 = vpop.f32.mrb[0].mxu0
        %2257 = vmatprep.mubr.f32.mxu0 0.0
        %2258 = vmatmul.mubr.f32.gmra.mrb[0].mxu0 %v2148
        %v2259 = vpop.f32.mrb[0].mxu0
        %v2260 = vadd.f32 0.0, %v2259
        %v2261 = vpop.f32.mrb[0].mxu0
        %2262 = vmatprep.mubr.f32.mxu0 0.0
        %2263 = vmatmul.mubr.f32.gmra.mrb[0].mxu0 %v2149
        %v2264 = vpop.f32.mrb[0].mxu0
        %v2265 = vadd.f32 0.0, %v2264
        %v2266 = vpop.f32.mrb[0].mxu0
        %2267 = vmatprep.mubr.f32.mxu0 0.0
        %2268 = vmatmul.mubr.f32.gmra.mrb[0].mxu0 %v2150
        %v2269 = vpop.f32.mrb[0].mxu0
        %v2270 = vadd.f32 0.0, %v2269
        %v2271 = vpop.f32.mrb[0].mxu0
        %2272 = vdwg.mxu0
        %v2273 = vadd.f32 %v2135, %v2235
        %v2274 = vadd.f32 %v2136, %v2240
        %v2275 = vadd.f32 %v2137, %v2245
        %v2276 = vadd.f32 %v2138, %v2250
        %v2277 = vadd.f32 %v2139, %v2255
        %v2278 = vadd.f32 %v2140, %v2260
        %v2279 = vadd.f32 %v2141, %v2265
        %v2280 = vadd.f32 %v2142, %v2270
        %v2281 = vld [vmem:[%s9] sm:$0x1]
        %v2283 = vlaneseq
        %v2284 = vshrl.u32 %v2283, 7
        %v2285 = vsub.s32 0, %v2284
        %v2286 = vrot.slane %v2281, %v2285
        %v2288 = vadd.f32 %v2273, %v2286
        %v2289 = vadd.f32 %v2274, %v2286
        %v2290 = vadd.f32 %v2275, %v2286
        %v2291 = vadd.f32 %v2276, %v2286
        %v2292 = vadd.f32 %v2277, %v2286
        %v2293 = vadd.f32 %v2278, %v2286
        %v2294 = vadd.f32 %v2279, %v2286
        %v2295 = vadd.f32 %v2280, %v2286
        %2296 = vst [vmem:[%s421] sm:$0xff] %v2288
        %2297 = vst [vmem:[%s421 + $0x8] sm:$0xff] %v2289
        %2298 = vst [vmem:[%s421 + $0x10] sm:$0xff] %v2290
        %2299 = vst [vmem:[%s421 + $0x18] sm:$0xff] %v2291
        %2300 = vst [vmem:[%s421 + $0x20] sm:$0xff] %v2292
        %2301 = vst [vmem:[%s421 + $0x28] sm:$0xff] %v2293
        %2302 = vst [vmem:[%s421 + $0x30] sm:$0xff] %v2294
        %2303 = vst [vmem:[%s421 + $0x38] sm:$0xff] %v2295
        %s2304 = sand.u32 %s256, 1
        %s2305 = scalar_lea.sflag [#allocation5], %s2304
        %s2306 = sand.u32 %s256, 1
        %s2307 = smul.addr %s2306, 64
        %s2308 = scalar_lea.vmem [#allocation9], %s2307
        // Predicated region
        $region73: #{tpu_custom_call.1} parent=59 // pred_check
          %p2309 = pneg %p266
        $region74: #{tpu_custom_call.1} parent=59 // pred_check_branch
          %2311 = sbr.rel (%p2309) target = $region76
        $region75: #{tpu_custom_call.1} parent=59 // pred_region
          %s2313 = ssub.s32 1024, 1024
          %2314 = vsyncadd %s2305, %s2313
          %s2315 = smul.addr %s28, 8
          %s2316 = smul.addr %s2315, 128
          %s2317 = scalar_lea.hbm %s10, %s2316
          %s2318 = sshll.u32 %s2308, 4
          %s2319 = int_to_ptr.vmem [resolvable:$true] %s2318
          %2324 = dma.vmem_to_hbm [thread:$0]  %s2319, 1024, %s2317, %s2305, 128, 128, 8
        $region76: #{tpu_custom_call.1} parent=59 // pred_fallthru
          _
      $region60: #{tpu_custom_call.1} parent=5 // pred_fallthru
        _
      %p2325 = scmp.le.s32.totalorder 2, %s23
      // Predicated region
      $region77: #{tpu_custom_call.1} parent=5 // pred_check
        %p2326 = pneg %p2325
      $region78: #{tpu_custom_call.1} parent=5 // pred_check_branch
        %2328 = sbr.rel (%p2326) target = $region80
      $region79: #{tpu_custom_call.1} parent=5 // pred_region
        %s2329 = ssub.s32 %s23, 2
        // Predicated region
        $region81: #{tpu_custom_call.1} parent=79 // pred_check
          %p2330 = pneg %p272
        $region82: #{tpu_custom_call.1} parent=79 // pred_check_branch
          %2332 = sbr.rel (%p2330) target = $region84
        $region83: #{tpu_custom_call.1} parent=79 // pred_region
          %s2333 = sand.u32 %s257, 1
          %s2334 = scalar_lea.sflag [#allocation5], %s2333
          %s2335 = sand.u32 %s257, 1
          %s2336 = smul.addr %s2335, 64
          %s2337 = scalar_lea.vmem [#allocation9], %s2336
          %2338 = dma.done %s2334, 1024
        $region84: #{tpu_custom_call.1} parent=79 // pred_fallthru
          _
      $region80: #{tpu_custom_call.1} parent=5 // pred_fallthru
        _
    $region6: #{tpu_custom_call.1} parent=1 // loop_footer
      %s27 = sadd.s32 1, %s23
    $region7: #{tpu_custom_call.1} parent=1 // loop_footer_branch
      %22 = sbr.rel target = $region3
    $region8: #{tpu_custom_call.1} parent=1 // loop_exit
      _
    %2339 = vsyncpa [#allocation4], 1
    %s2340 = scalar_lea.sflag [#allocation4], 1
    %2341 = vsyncpa %s2340, 1
    %2342 = vsyncpa [#allocation7], 1
    %2343 = vsyncpa [#allocation5], 1
    %s2344 = scalar_lea.sflag [#allocation5], 1
    %2345 = vsyncpa %s2344, 1

</llo_original>
